<compile_context>
chip_gen: v7x
topology: tpu7x:2x2x1
jax: 0.10.0
libtpu: 0.0.40
codegen_flags: <defaults>
</compile_context>

<pallas_src>
import numpy as np
import jax
import jax.numpy as jnp
from jax import lax
from jax.experimental import pallas as pl
from jax.experimental.pallas import tpu as pltpu


# ------------------------------ Pallas kernel ------------------------------ #
def _make_kernel(th, wpad, w_valid):
    """Per-tile kernel factory (static tile rows `th`, lane-dense width `wpad`)."""
    n_strips = th // 8
    # If W is already a multiple of 128 there is no zero pad column, so the
    # circular lane roll would wrap real data into the conv border -> mask it.
    need_col_mask = (wpad == w_valid)

    def kernel(center_ref, halo_ref, fi_ref, w1_ref, b1_ref, w2_ref, b2_ref,
               out_ref, chan_ref):
        # center_ref: (3, th, wpad)   fftshifted real spectrum, this tile's rows
        # halo_ref  : (1, 3, 2, wpad) row above / row below this tile
        # fi_ref    : (3, th, wpad)   fftshifted imag spectrum
        # w*/b*     : flat conv weights / biases in SMEM
        # out_ref   : (9, th, wpad)   rows 0-2 att, 3-5 att*Re(F), 6-8 att*Im(F)
        # chan_ref  : (3, th+2, wpad) VMEM scratch: [top halo, tile rows, bottom halo]

        # --- assemble row-halo'd channel buffers (one shifted store per chan) ---
        for ci in range(3):
            chan_ref[ci, 0:1, :] = halo_ref[0, ci, 0:1, :]
            chan_ref[ci, 1:th + 1, :] = center_ref[ci, :, :]
            chan_ref[ci, th + 1:th + 2, :] = halo_ref[0, ci, 1:2, :]

        # --- read all conv parameters from SMEM once (hoisted out of the loop) ---
        w1 = [w1_ref[i] for i in range(135)]   # (co, ci, kh, kw) row-major
        b1 = [b1_ref[i] for i in range(5)]
        w2 = [w2_ref[i] for i in range(15)]    # (co, ci) row-major
        b2 = [b2_ref[i] for i in range(3)]

        if need_col_mask:
            lane = lax.broadcasted_iota(jnp.int32, (8, wpad), 1)
            mask_l = (lane != 0).astype(jnp.float32)          # zero the col -1 wrap
            mask_r = (lane != wpad - 1).astype(jnp.float32)   # zero the col W  wrap

        # --- 8-row strips: (8, wpad) accumulators with short live ranges so the
        #     135 MACs/pixel stay on the VALU instead of VMEM ld/st slots. ---
        def strip(s, carry):
            r0 = pl.multiple_of(s * 8, 8)
            accs = [None] * 5
            for ci in range(3):
                for di in range(3):
                    if di == 1:
                        win_c = center_ref[ci, pl.ds(r0, 8), :]        # aligned
                    else:
                        win_c = chan_ref[ci, pl.ds(r0 + di, 8), :]     # di=0 aligned, di=2 offset 2
                    # column taps via XLU lane rolls: col j-1 / col j+1
                    win_l = pltpu.roll(win_c, shift=1, axis=1)
                    win_r = pltpu.roll(win_c, shift=wpad - 1, axis=1)
                    if need_col_mask:
                        win_l = win_l * mask_l
                        win_r = win_r * mask_r
                    wins = (win_l, win_c, win_r)                       # dj = 0, 1, 2
                    for dj in range(3):
                        win = wins[dj]
                        base = ci * 9 + di * 3 + dj
                        for co in range(5):
                            t = w1[co * 27 + base] * win
                            accs[co] = t if accs[co] is None else accs[co] + t
            # conv1 bias (added once) + sigmoid (EUP)
            a1 = [jax.nn.sigmoid(accs[co] + b1[co]) for co in range(5)]
            # conv2 (1x1) + sigmoid, fused with attention * spectrum
            for co in range(3):
                h2 = w2[co * 5] * a1[0]
                for cj in range(1, 5):
                    h2 = h2 + w2[co * 5 + cj] * a1[cj]
                att = jax.nn.sigmoid(h2 + b2[co])
                f_re = center_ref[co, pl.ds(r0, 8), :]
                f_im = fi_ref[co, pl.ds(r0, 8), :]
                out_ref[co, pl.ds(r0, 8), :] = att
                out_ref[3 + co, pl.ds(r0, 8), :] = att * f_re
                out_ref[6 + co, pl.ds(r0, 8), :] = att * f_im
            return carry

        lax.fori_loop(0, n_strips, strip, 0)

    return kernel


# ------------------------------- glue helpers ------------------------------ #
def rgb2ycbcr(img):
    r, g, b = img[0], img[1], img[2]
    y = 0.299 * r + 0.587 * g + 0.114 * b
    cb = 0.564 * (b - y)
    cr = 0.713 * (r - y)
    return jnp.stack([y, cb, cr], axis=0)


def ycbcr2rgb(img):
    y, cb, cr = img[0], img[1], img[2]
    b = cb / 0.564 + y
    r = cr / 0.713 + y
    g = (y - 0.299 * r - 0.114 * b) / 0.587
    return jnp.stack([r, g, b], axis=0)


def init_params(key):
    # Same shapes / default-init style as torch.nn.Conv2d(3,5,3) and Conv2d(5,3,1)
    k1, k2, k3, k4 = jax.random.split(key, 4)
    bound1 = 1.0 / np.sqrt(3 * 3 * 3)
    w1 = jax.random.uniform(k1, (5, 3, 3, 3), jnp.float32, -bound1, bound1)
    b1 = jax.random.uniform(k2, (5,), jnp.float32, -bound1, bound1)
    bound2 = 1.0 / np.sqrt(5 * 1 * 1)
    w2 = jax.random.uniform(k3, (3, 5, 1, 1), jnp.float32, -bound2, bound2)
    b2 = jax.random.uniform(k4, (3,), jnp.float32, -bound2, bound2)
    return w1, b1, w2, b2


def _round_up(x, m):
    return (x + m - 1) // m * m


def _vmem_capacity_bytes():
    # v7x has 64 MiB VMEM per TensorCore vs 128 MiB on v5e/v6e -- derive the
    # tile budget from the actual generation, with a conservative fallback.
    try:
        return int(pltpu.get_tpu_info().vmem_capacity_bytes)
    except Exception:
        return 64 * 1024 * 1024


def _choose_tile_rows(h, wpad, vmem_cap):
    budget = min(vmem_cap // 2, 64 * 1024 * 1024)
    # double-buffered in/out blocks (~15 f32 planes x 2) + chan scratch (~3 planes)
    bytes_per_px = (2 * (3 + 3 + 9) + 3) * 4
    px_cap = max(8 * 128, min(budget // bytes_per_px, 256 * 1024))
    cap_rows = max(8, (px_cap // max(wpad, 1)) // 8 * 8)
    # keep both v7x TensorCores busy for small images: aim for nt >= 2
    half = _round_up(-(-h // 2), 8)
    return max(8, min(cap_rows, half))


def frequency_attention_forward(x, w1, b1, w2, b2, ycbcr=False, tile_rows=None):
    """Matches FrequencyAttention.forward(x, ycbcr). x: (3, H, W) float32.

    Returns (output_image, attention)."""
    if ycbcr:
        x = rgb2ycbcr(x)
    c, h, w = x.shape

    # TODO(synk): FFT / fftshift-roll / IFFT have no Pallas primitive; folding the
    # roll + Re/Im split into the kernel (modular-row index_map + in-kernel lane
    # roll) would save another spectrum round-trip but is left as jnp glue.
    f = jnp.fft.fft2(x.astype(jnp.float32), axes=(-2, -1))            # complex64
    f = jnp.roll(f, (h // 2, w // 2), axis=(-2, -1))                  # torch.roll equivalent
    fr = jnp.real(f).astype(jnp.float32)   # torch complex->float32 keeps the real part
    fi = jnp.imag(f).astype(jnp.float32)

    wpad = max(128, _round_up(w, 128))                                # lane-dense blocks
    vmem_cap = _vmem_capacity_bytes()
    if tile_rows is None:
        th = _choose_tile_rows(h, wpad, vmem_cap)
    else:
        th = max(8, _round_up(int(tile_rows), 8))
    nt = -(-h // th)
    hp = nt * th

    center = jnp.pad(fr, ((0, 0), (0, hp - h), (0, wpad - w)))        # (3, hp, wpad)
    fi_p = jnp.pad(fi, ((0, 0), (0, hp - h), (0, wpad - w)))          # (3, hp, wpad)

    # Tiny per-tile halo: only the single row above and below each tile is
    # duplicated (replaces the previous whole-spectrum "conv_in" stack).
    def _row(r):
        if 0 <= r < hp:
            return center[:, r:r + 1, :]
        return jnp.zeros((3, 1, wpad), jnp.float32)

    halo = jnp.stack(
        [jnp.concatenate([_row(i * th - 1), _row((i + 1) * th)], axis=1)
         for i in range(nt)], axis=0)                                 # (nt, 3, 2, wpad)

    smem = lambda: pl.BlockSpec(memory_space=pltpu.MemorySpace.SMEM)
    kernel = _make_kernel(th, wpad, w)
    fused = pl.pallas_call(
        kernel,
        out_shape=jax.ShapeDtypeStruct((9, hp, wpad), jnp.float32),
        grid=(nt,),
        in_specs=[
            pl.BlockSpec((3, th, wpad), lambda i: (0, i, 0)),
            pl.BlockSpec((1, 3, 2, wpad), lambda i: (i, 0, 0, 0)),
            pl.BlockSpec((3, th, wpad), lambda i: (0, i, 0)),
            smem(), smem(), smem(), smem(),
        ],
        out_specs=pl.BlockSpec((9, th, wpad), lambda i: (0, i, 0)),
        scratch_shapes=[pltpu.VMEM((3, th + 2, wpad), jnp.float32)],
        compiler_params=pltpu.CompilerParams(
            dimension_semantics=("parallel",),      # shards row-tiles over v7x's 2 TCs
            vmem_limit_bytes=min(int(vmem_cap * 3 // 4), 96 * 1024 * 1024),
        ),
    )(center, halo, fi_p,
      w1.reshape(-1).astype(jnp.float32), b1.astype(jnp.float32),
      w2.reshape(-1).astype(jnp.float32), b2.astype(jnp.float32))

    att = fused[0:3, :h, :w]
    f_mod = lax.complex(fused[3:6, :h, :w], fused[6:9, :h, :w])
    out = jnp.abs(jnp.fft.ifft2(f_mod, axes=(-2, -1)))
    if ycbcr:
        out = ycbcr2rgb(out)
    return out, att


# ---------------------------- pure-JAX reference --------------------------- #
def reference_forward(x, w1, b1, w2, b2):
    c, h, w = x.shape
    f = jnp.fft.fft2(x.astype(jnp.float32), axes=(-2, -1))
    f = jnp.roll(f, (h // 2, w // 2), axis=(-2, -1))
    fr = jnp.real(f).astype(jnp.float32)[None]                         # (1,3,h,w)
    c1 = lax.conv_general_dilated(fr, w1, (1, 1), 'SAME',
                                  dimension_numbers=('NCHW', 'OIHW', 'NCHW'))
    a1 = jax.nn.sigmoid(c1 + b1.reshape(1, 5, 1, 1))
    c2 = lax.conv_general_dilated(a1, w2, (1, 1), 'VALID',
                                  dimension_numbers=('NCHW', 'OIHW', 'NCHW'))
    att = jax.nn.sigmoid(c2 + b2.reshape(1, 3, 1, 1))[0]
    fm = att.astype(jnp.complex64) * f
    out = jnp.abs(jnp.fft.ifft2(fm, axes=(-2, -1)))
    return out, att


# ----------------------------------- main ----------------------------------- #
if __name__ == "__main__":
    key = jax.random.PRNGKey(0)
    kx, kx2, kx3, kp = jax.random.split(key, 4)
    w1, b1, w2, b2 = init_params(kp)

    # Case 1: small image, auto tiling (th=8 -> nt=2 so both v7x cores are used).
    x = jax.random.normal(kx, (3, 16, 16), jnp.float32)
    out, att = frequency_attention_forward(x, w1, b1, w2, b2, ycbcr=False)
    out = jax.block_until_ready(out)
    att = jax.block_until_ready(att)
    ref_out, ref_att = reference_forward(x, w1, b1, w2, b2)
    assert np.allclose(np.asarray(att), np.asarray(ref_att), rtol=1e-4, atol=1e-4), "attention mismatch"
    assert np.allclose(np.asarray(out), np.asarray(ref_out), rtol=1e-4, atol=1e-3), "output mismatch"

    # Case 2: force small row-tiles so the multi-tile halo'd path (grid=(4,),
    # "parallel") is exercised at a small shape.
    x2 = jax.random.normal(kx2, (3, 32, 32), jnp.float32)
    out2, att2 = frequency_attention_forward(x2, w1, b1, w2, b2, ycbcr=False, tile_rows=8)
    out2 = jax.block_until_ready(out2)
    att2 = jax.block_until_ready(att2)
    ref_out2, ref_att2 = reference_forward(x2, w1, b1, w2, b2)
    assert np.allclose(np.asarray(att2), np.asarray(ref_att2), rtol=1e-4, atol=1e-4), "attention mismatch (tiled)"
    assert np.allclose(np.asarray(out2), np.asarray(ref_out2), rtol=1e-4, atol=1e-3), "output mismatch (tiled)"

    # Case 3: W an exact multiple of 128 (exercises the in-kernel edge mask for
    # the circular column roll), H not divisible by the tile (row padding), and
    # multiple 8-row strips per tile.  Slightly looser tolerance: larger-image
    # spectra have larger pre-sigmoid magnitudes, so f32 summation-order noise
    # grows with H*W.
    x3 = jax.random.normal(kx3, (3, 40, 128), jnp.float32)
    out3, att3 = frequency_attention_forward(x3, w1, b1, w2, b2, ycbcr=False)
    out3 = jax.block_until_ready(out3)
    att3 = jax.block_until_ready(att3)
    ref_out3, ref_att3 = reference_forward(x3, w1, b1, w2, b2)
    assert np.allclose(np.asarray(att3), np.asarray(ref_att3), rtol=1e-3, atol=1e-3), "attention mismatch (128-wide)"
    assert np.allclose(np.asarray(out3), np.asarray(ref_out3), rtol=1e-3, atol=5e-3), "output mismatch (128-wide)"

    print("KERNEL_OK")
</pallas_src>

<mosaic_0001>
module attributes {stable_mosaic.version = 11 : i64} {
  func.func @kernel(%arg0: i32, %arg1: memref<3x8x128xf32, #tpu.memory_space<vmem>>, %arg2: memref<1x3x2x128xf32, #tpu.memory_space<vmem>>, %arg3: memref<3x8x128xf32, #tpu.memory_space<vmem>>, %arg4: memref<135xf32, #tpu.memory_space<smem>>, %arg5: memref<5xf32, #tpu.memory_space<smem>>, %arg6: memref<15xf32, #tpu.memory_space<smem>>, %arg7: memref<3xf32, #tpu.memory_space<smem>>, %arg8: memref<9x8x128xf32, #tpu.memory_space<vmem>>, %arg9: memref<3x10x128xf32, #tpu.memory_space<vmem>>) attributes {dimension_semantics = [#tpu.dimension_semantics<parallel>], iteration_bounds = array<i64: 2>, scalar_prefetch = 0 : i64, scratch_operands = 1 : i64, tpu.core_type = #tpu.core_type<tc>, window_params = [{transform_indices = @transform_0, window_bounds = array<i64: 3, 8, 128>}, {transform_indices = @transform_1, window_bounds = array<i64: 1, 3, 2, 128>}, {transform_indices = @transform_2, window_bounds = array<i64: 3, 8, 128>}, {transform_indices = @transform_3, window_bounds = array<i64: 135>}, {transform_indices = @transform_4, window_bounds = array<i64: 5>}, {transform_indices = @transform_5, window_bounds = array<i64: 15>}, {transform_indices = @transform_6, window_bounds = array<i64: 3>}, {transform_indices = @transform_7, window_bounds = array<i64: 9, 8, 128>}]} {
    %c0 = arith.constant 0 : index
    %c0_0 = arith.constant 0 : index
    %c0_1 = arith.constant 0 : index
    %c0_2 = arith.constant 0 : index
    %0 = vector.load %arg2[%c0, %c0_0, %c0_1, %c0_2] : memref<1x3x2x128xf32, #tpu.memory_space<vmem>>, vector<1x1x1x128xf32>
    %1 = vector.shape_cast %0 : vector<1x1x1x128xf32> to vector<1x128xf32>
    %c0_3 = arith.constant 0 : index
    %c0_4 = arith.constant 0 : index
    %c0_5 = arith.constant 0 : index
    %2 = vector.load %arg9[%c0_3, %c0_4, %c0_5] : memref<3x10x128xf32, #tpu.memory_space<vmem>>, vector<1x1x128xf32>
    %3 = vector.shape_cast %2 : vector<1x1x128xf32> to vector<1x128xf32>
    %4 = vector.shape_cast %1 : vector<1x128xf32> to vector<1x1x128xf32>
    tpu.vector_store %arg9[%c0_3, %c0_4, %c0_5], %4 {strides = array<i32>} : memref<3x10x128xf32, #tpu.memory_space<vmem>>, vector<1x1x128xf32>,
    %c0_6 = arith.constant 0 : index
    %c0_7 = arith.constant 0 : index
    %c0_8 = arith.constant 0 : index
    %5 = vector.load %arg1[%c0_6, %c0_7, %c0_8] : memref<3x8x128xf32, #tpu.memory_space<vmem>>, vector<1x8x128xf32>
    %6 = vector.shape_cast %5 : vector<1x8x128xf32> to vector<8x128xf32>
    %c0_9 = arith.constant 0 : index
    %c1 = arith.constant 1 : index
    %c0_10 = arith.constant 0 : index
    %7 = vector.load %arg9[%c0_9, %c1, %c0_10] : memref<3x10x128xf32, #tpu.memory_space<vmem>>, vector<1x8x128xf32>
    %8 = vector.shape_cast %7 : vector<1x8x128xf32> to vector<8x128xf32>
    %9 = vector.shape_cast %6 : vector<8x128xf32> to vector<1x8x128xf32>
    tpu.vector_store %arg9[%c0_9, %c1, %c0_10], %9 {strides = array<i32>} : memref<3x10x128xf32, #tpu.memory_space<vmem>>, vector<1x8x128xf32>,
    %c0_11 = arith.constant 0 : index
    %c0_12 = arith.constant 0 : index
    %c1_13 = arith.constant 1 : index
    %c0_14 = arith.constant 0 : index
    %10 = vector.load %arg2[%c0_11, %c0_12, %c1_13, %c0_14] : memref<1x3x2x128xf32, #tpu.memory_space<vmem>>, vector<1x1x1x128xf32>
    %11 = vector.shape_cast %10 : vector<1x1x1x128xf32> to vector<1x128xf32>
    %c0_15 = arith.constant 0 : index
    %c9 = arith.constant 9 : index
    %c0_16 = arith.constant 0 : index
    %12 = vector.load %arg9[%c0_15, %c9, %c0_16] : memref<3x10x128xf32, #tpu.memory_space<vmem>>, vector<1x1x128xf32>
    %13 = vector.shape_cast %12 : vector<1x1x128xf32> to vector<1x128xf32>
    %14 = vector.shape_cast %11 : vector<1x128xf32> to vector<1x1x128xf32>
    tpu.vector_store %arg9[%c0_15, %c9, %c0_16], %14 {strides = array<i32>} : memref<3x10x128xf32, #tpu.memory_space<vmem>>, vector<1x1x128xf32>,
    %c0_17 = arith.constant 0 : index
    %c1_18 = arith.constant 1 : index
    %c0_19 = arith.constant 0 : index
    %c0_20 = arith.constant 0 : index
    %15 = vector.load %arg2[%c0_17, %c1_18, %c0_19, %c0_20] : memref<1x3x2x128xf32, #tpu.memory_space<vmem>>, vector<1x1x1x128xf32>
    %16 = vector.shape_cast %15 : vector<1x1x1x128xf32> to vector<1x128xf32>
    %c1_21 = arith.constant 1 : index
    %c0_22 = arith.constant 0 : index
    %c0_23 = arith.constant 0 : index
    %17 = vector.load %arg9[%c1_21, %c0_22, %c0_23] : memref<3x10x128xf32, #tpu.memory_space<vmem>>, vector<1x1x128xf32>
    %18 = vector.shape_cast %17 : vector<1x1x128xf32> to vector<1x128xf32>
    %19 = vector.shape_cast %16 : vector<1x128xf32> to vector<1x1x128xf32>
    tpu.vector_store %arg9[%c1_21, %c0_22, %c0_23], %19 {strides = array<i32>} : memref<3x10x128xf32, #tpu.memory_space<vmem>>, vector<1x1x128xf32>,
    %c1_24 = arith.constant 1 : index
    %c0_25 = arith.constant 0 : index
    %c0_26 = arith.constant 0 : index
    %20 = vector.load %arg1[%c1_24, %c0_25, %c0_26] : memref<3x8x128xf32, #tpu.memory_space<vmem>>, vector<1x8x128xf32>
    %21 = vector.shape_cast %20 : vector<1x8x128xf32> to vector<8x128xf32>
    %c1_27 = arith.constant 1 : index
    %c1_28 = arith.constant 1 : index
    %c0_29 = arith.constant 0 : index
    %22 = vector.load %arg9[%c1_27, %c1_28, %c0_29] : memref<3x10x128xf32, #tpu.memory_space<vmem>>, vector<1x8x128xf32>
    %23 = vector.shape_cast %22 : vector<1x8x128xf32> to vector<8x128xf32>
    %24 = vector.shape_cast %21 : vector<8x128xf32> to vector<1x8x128xf32>
    tpu.vector_store %arg9[%c1_27, %c1_28, %c0_29], %24 {strides = array<i32>} : memref<3x10x128xf32, #tpu.memory_space<vmem>>, vector<1x8x128xf32>,
    %c0_30 = arith.constant 0 : index
    %c1_31 = arith.constant 1 : index
    %c1_32 = arith.constant 1 : index
    %c0_33 = arith.constant 0 : index
    %25 = vector.load %arg2[%c0_30, %c1_31, %c1_32, %c0_33] : memref<1x3x2x128xf32, #tpu.memory_space<vmem>>, vector<1x1x1x128xf32>
    %26 = vector.shape_cast %25 : vector<1x1x1x128xf32> to vector<1x128xf32>
    %c1_34 = arith.constant 1 : index
    %c9_35 = arith.constant 9 : index
    %c0_36 = arith.constant 0 : index
    %27 = vector.load %arg9[%c1_34, %c9_35, %c0_36] : memref<3x10x128xf32, #tpu.memory_space<vmem>>, vector<1x1x128xf32>
    %28 = vector.shape_cast %27 : vector<1x1x128xf32> to vector<1x128xf32>
    %29 = vector.shape_cast %26 : vector<1x128xf32> to vector<1x1x128xf32>
    tpu.vector_store %arg9[%c1_34, %c9_35, %c0_36], %29 {strides = array<i32>} : memref<3x10x128xf32, #tpu.memory_space<vmem>>, vector<1x1x128xf32>,
    %c0_37 = arith.constant 0 : index
    %c2 = arith.constant 2 : index
    %c0_38 = arith.constant 0 : index
    %c0_39 = arith.constant 0 : index
    %30 = vector.load %arg2[%c0_37, %c2, %c0_38, %c0_39] : memref<1x3x2x128xf32, #tpu.memory_space<vmem>>, vector<1x1x1x128xf32>
    %31 = vector.shape_cast %30 : vector<1x1x1x128xf32> to vector<1x128xf32>
    %c2_40 = arith.constant 2 : index
    %c0_41 = arith.constant 0 : index
    %c0_42 = arith.constant 0 : index
    %32 = vector.load %arg9[%c2_40, %c0_41, %c0_42] : memref<3x10x128xf32, #tpu.memory_space<vmem>>, vector<1x1x128xf32>
    %33 = vector.shape_cast %32 : vector<1x1x128xf32> to vector<1x128xf32>
    %34 = vector.shape_cast %31 : vector<1x128xf32> to vector<1x1x128xf32>
    tpu.vector_store %arg9[%c2_40, %c0_41, %c0_42], %34 {strides = array<i32>} : memref<3x10x128xf32, #tpu.memory_space<vmem>>, vector<1x1x128xf32>,
    %c2_43 = arith.constant 2 : index
    %c0_44 = arith.constant 0 : index
    %c0_45 = arith.constant 0 : index
    %35 = vector.load %arg1[%c2_43, %c0_44, %c0_45] : memref<3x8x128xf32, #tpu.memory_space<vmem>>, vector<1x8x128xf32>
    %36 = vector.shape_cast %35 : vector<1x8x128xf32> to vector<8x128xf32>
    %c2_46 = arith.constant 2 : index
    %c1_47 = arith.constant 1 : index
    %c0_48 = arith.constant 0 : index
    %37 = vector.load %arg9[%c2_46, %c1_47, %c0_48] : memref<3x10x128xf32, #tpu.memory_space<vmem>>, vector<1x8x128xf32>
    %38 = vector.shape_cast %37 : vector<1x8x128xf32> to vector<8x128xf32>
    %39 = vector.shape_cast %36 : vector<8x128xf32> to vector<1x8x128xf32>
    tpu.vector_store %arg9[%c2_46, %c1_47, %c0_48], %39 {strides = array<i32>} : memref<3x10x128xf32, #tpu.memory_space<vmem>>, vector<1x8x128xf32>,
    %c0_49 = arith.constant 0 : index
    %c2_50 = arith.constant 2 : index
    %c1_51 = arith.constant 1 : index
    %c0_52 = arith.constant 0 : index
    %40 = vector.load %arg2[%c0_49, %c2_50, %c1_51, %c0_52] : memref<1x3x2x128xf32, #tpu.memory_space<vmem>>, vector<1x1x1x128xf32>
    %41 = vector.shape_cast %40 : vector<1x1x1x128xf32> to vector<1x128xf32>
    %c2_53 = arith.constant 2 : index
    %c9_54 = arith.constant 9 : index
    %c0_55 = arith.constant 0 : index
    %42 = vector.load %arg9[%c2_53, %c9_54, %c0_55] : memref<3x10x128xf32, #tpu.memory_space<vmem>>, vector<1x1x128xf32>
    %43 = vector.shape_cast %42 : vector<1x1x128xf32> to vector<1x128xf32>
    %44 = vector.shape_cast %41 : vector<1x128xf32> to vector<1x1x128xf32>
    tpu.vector_store %arg9[%c2_53, %c9_54, %c0_55], %44 {strides = array<i32>} : memref<3x10x128xf32, #tpu.memory_space<vmem>>, vector<1x1x128xf32>,
    %c0_56 = arith.constant 0 : index
    %45 = memref.load %arg4[%c0_56] : memref<135xf32, #tpu.memory_space<smem>>
    %c1_57 = arith.constant 1 : index
    %46 = memref.load %arg4[%c1_57] : memref<135xf32, #tpu.memory_space<smem>>
    %c2_58 = arith.constant 2 : index
    %47 = memref.load %arg4[%c2_58] : memref<135xf32, #tpu.memory_space<smem>>
    %c3 = arith.constant 3 : index
    %48 = memref.load %arg4[%c3] : memref<135xf32, #tpu.memory_space<smem>>
    %c4 = arith.constant 4 : index
    %49 = memref.load %arg4[%c4] : memref<135xf32, #tpu.memory_space<smem>>
    %c5 = arith.constant 5 : index
    %50 = memref.load %arg4[%c5] : memref<135xf32, #tpu.memory_space<smem>>
    %c6 = arith.constant 6 : index
    %51 = memref.load %arg4[%c6] : memref<135xf32, #tpu.memory_space<smem>>
    %c7 = arith.constant 7 : index
    %52 = memref.load %arg4[%c7] : memref<135xf32, #tpu.memory_space<smem>>
    %c8 = arith.constant 8 : index
    %53 = memref.load %arg4[%c8] : memref<135xf32, #tpu.memory_space<smem>>
    %c9_59 = arith.constant 9 : index
    %54 = memref.load %arg4[%c9_59] : memref<135xf32, #tpu.memory_space<smem>>
    %c10 = arith.constant 10 : index
    %55 = memref.load %arg4[%c10] : memref<135xf32, #tpu.memory_space<smem>>
    %c11 = arith.constant 11 : index
    %56 = memref.load %arg4[%c11] : memref<135xf32, #tpu.memory_space<smem>>
    %c12 = arith.constant 12 : index
    %57 = memref.load %arg4[%c12] : memref<135xf32, #tpu.memory_space<smem>>
    %c13 = arith.constant 13 : index
    %58 = memref.load %arg4[%c13] : memref<135xf32, #tpu.memory_space<smem>>
    %c14 = arith.constant 14 : index
    %59 = memref.load %arg4[%c14] : memref<135xf32, #tpu.memory_space<smem>>
    %c15 = arith.constant 15 : index
    %60 = memref.load %arg4[%c15] : memref<135xf32, #tpu.memory_space<smem>>
    %c16 = arith.constant 16 : index
    %61 = memref.load %arg4[%c16] : memref<135xf32, #tpu.memory_space<smem>>
    %c17 = arith.constant 17 : index
    %62 = memref.load %arg4[%c17] : memref<135xf32, #tpu.memory_space<smem>>
    %c18 = arith.constant 18 : index
    %63 = memref.load %arg4[%c18] : memref<135xf32, #tpu.memory_space<smem>>
    %c19 = arith.constant 19 : index
    %64 = memref.load %arg4[%c19] : memref<135xf32, #tpu.memory_space<smem>>
    %c20 = arith.constant 20 : index
    %65 = memref.load %arg4[%c20] : memref<135xf32, #tpu.memory_space<smem>>
    %c21 = arith.constant 21 : index
    %66 = memref.load %arg4[%c21] : memref<135xf32, #tpu.memory_space<smem>>
    %c22 = arith.constant 22 : index
    %67 = memref.load %arg4[%c22] : memref<135xf32, #tpu.memory_space<smem>>
    %c23 = arith.constant 23 : index
    %68 = memref.load %arg4[%c23] : memref<135xf32, #tpu.memory_space<smem>>
    %c24 = arith.constant 24 : index
    %69 = memref.load %arg4[%c24] : memref<135xf32, #tpu.memory_space<smem>>
    %c25 = arith.constant 25 : index
    %70 = memref.load %arg4[%c25] : memref<135xf32, #tpu.memory_space<smem>>
    %c26 = arith.constant 26 : index
    %71 = memref.load %arg4[%c26] : memref<135xf32, #tpu.memory_space<smem>>
    %c27 = arith.constant 27 : index
    %72 = memref.load %arg4[%c27] : memref<135xf32, #tpu.memory_space<smem>>
    %c28 = arith.constant 28 : index
    %73 = memref.load %arg4[%c28] : memref<135xf32, #tpu.memory_space<smem>>
    %c29 = arith.constant 29 : index
    %74 = memref.load %arg4[%c29] : memref<135xf32, #tpu.memory_space<smem>>
    %c30 = arith.constant 30 : index
    %75 = memref.load %arg4[%c30] : memref<135xf32, #tpu.memory_space<smem>>
    %c31 = arith.constant 31 : index
    %76 = memref.load %arg4[%c31] : memref<135xf32, #tpu.memory_space<smem>>
    %c32 = arith.constant 32 : index
    %77 = memref.load %arg4[%c32] : memref<135xf32, #tpu.memory_space<smem>>
    %c33 = arith.constant 33 : index
    %78 = memref.load %arg4[%c33] : memref<135xf32, #tpu.memory_space<smem>>
    %c34 = arith.constant 34 : index
    %79 = memref.load %arg4[%c34] : memref<135xf32, #tpu.memory_space<smem>>
    %c35 = arith.constant 35 : index
    %80 = memref.load %arg4[%c35] : memref<135xf32, #tpu.memory_space<smem>>
    %c36 = arith.constant 36 : index
    %81 = memref.load %arg4[%c36] : memref<135xf32, #tpu.memory_space<smem>>
    %c37 = arith.constant 37 : index
    %82 = memref.load %arg4[%c37] : memref<135xf32, #tpu.memory_space<smem>>
    %c38 = arith.constant 38 : index
    %83 = memref.load %arg4[%c38] : memref<135xf32, #tpu.memory_space<smem>>
    %c39 = arith.constant 39 : index
    %84 = memref.load %arg4[%c39] : memref<135xf32, #tpu.memory_space<smem>>
    %c40 = arith.constant 40 : index
    %85 = memref.load %arg4[%c40] : memref<135xf32, #tpu.memory_space<smem>>
    %c41 = arith.constant 41 : index
    %86 = memref.load %arg4[%c41] : memref<135xf32, #tpu.memory_space<smem>>
    %c42 = arith.constant 42 : index
    %87 = memref.load %arg4[%c42] : memref<135xf32, #tpu.memory_space<smem>>
    %c43 = arith.constant 43 : index
    %88 = memref.load %arg4[%c43] : memref<135xf32, #tpu.memory_space<smem>>
    %c44 = arith.constant 44 : index
    %89 = memref.load %arg4[%c44] : memref<135xf32, #tpu.memory_space<smem>>
    %c45 = arith.constant 45 : index
    %90 = memref.load %arg4[%c45] : memref<135xf32, #tpu.memory_space<smem>>
    %c46 = arith.constant 46 : index
    %91 = memref.load %arg4[%c46] : memref<135xf32, #tpu.memory_space<smem>>
    %c47 = arith.constant 47 : index
    %92 = memref.load %arg4[%c47] : memref<135xf32, #tpu.memory_space<smem>>
    %c48 = arith.constant 48 : index
    %93 = memref.load %arg4[%c48] : memref<135xf32, #tpu.memory_space<smem>>
    %c49 = arith.constant 49 : index
    %94 = memref.load %arg4[%c49] : memref<135xf32, #tpu.memory_space<smem>>
    %c50 = arith.constant 50 : index
    %95 = memref.load %arg4[%c50] : memref<135xf32, #tpu.memory_space<smem>>
    %c51 = arith.constant 51 : index
    %96 = memref.load %arg4[%c51] : memref<135xf32, #tpu.memory_space<smem>>
    %c52 = arith.constant 52 : index
    %97 = memref.load %arg4[%c52] : memref<135xf32, #tpu.memory_space<smem>>
    %c53 = arith.constant 53 : index
    %98 = memref.load %arg4[%c53] : memref<135xf32, #tpu.memory_space<smem>>
    %c54 = arith.constant 54 : index
    %99 = memref.load %arg4[%c54] : memref<135xf32, #tpu.memory_space<smem>>
    %c55 = arith.constant 55 : index
    %100 = memref.load %arg4[%c55] : memref<135xf32, #tpu.memory_space<smem>>
    %c56 = arith.constant 56 : index
    %101 = memref.load %arg4[%c56] : memref<135xf32, #tpu.memory_space<smem>>
    %c57 = arith.constant 57 : index
    %102 = memref.load %arg4[%c57] : memref<135xf32, #tpu.memory_space<smem>>
    %c58 = arith.constant 58 : index
    %103 = memref.load %arg4[%c58] : memref<135xf32, #tpu.memory_space<smem>>
    %c59 = arith.constant 59 : index
    %104 = memref.load %arg4[%c59] : memref<135xf32, #tpu.memory_space<smem>>
    %c60 = arith.constant 60 : index
    %105 = memref.load %arg4[%c60] : memref<135xf32, #tpu.memory_space<smem>>
    %c61 = arith.constant 61 : index
    %106 = memref.load %arg4[%c61] : memref<135xf32, #tpu.memory_space<smem>>
    %c62 = arith.constant 62 : index
    %107 = memref.load %arg4[%c62] : memref<135xf32, #tpu.memory_space<smem>>
    %c63 = arith.constant 63 : index
    %108 = memref.load %arg4[%c63] : memref<135xf32, #tpu.memory_space<smem>>
    %c64 = arith.constant 64 : index
    %109 = memref.load %arg4[%c64] : memref<135xf32, #tpu.memory_space<smem>>
    %c65 = arith.constant 65 : index
    %110 = memref.load %arg4[%c65] : memref<135xf32, #tpu.memory_space<smem>>
    %c66 = arith.constant 66 : index
    %111 = memref.load %arg4[%c66] : memref<135xf32, #tpu.memory_space<smem>>
    %c67 = arith.constant 67 : index
    %112 = memref.load %arg4[%c67] : memref<135xf32, #tpu.memory_space<smem>>
    %c68 = arith.constant 68 : index
    %113 = memref.load %arg4[%c68] : memref<135xf32, #tpu.memory_space<smem>>
    %c69 = arith.constant 69 : index
    %114 = memref.load %arg4[%c69] : memref<135xf32, #tpu.memory_space<smem>>
    %c70 = arith.constant 70 : index
    %115 = memref.load %arg4[%c70] : memref<135xf32, #tpu.memory_space<smem>>
    %c71 = arith.constant 71 : index
    %116 = memref.load %arg4[%c71] : memref<135xf32, #tpu.memory_space<smem>>
    %c72 = arith.constant 72 : index
    %117 = memref.load %arg4[%c72] : memref<135xf32, #tpu.memory_space<smem>>
    %c73 = arith.constant 73 : index
    %118 = memref.load %arg4[%c73] : memref<135xf32, #tpu.memory_space<smem>>
    %c74 = arith.constant 74 : index
    %119 = memref.load %arg4[%c74] : memref<135xf32, #tpu.memory_space<smem>>
    %c75 = arith.constant 75 : index
    %120 = memref.load %arg4[%c75] : memref<135xf32, #tpu.memory_space<smem>>
    %c76 = arith.constant 76 : index
    %121 = memref.load %arg4[%c76] : memref<135xf32, #tpu.memory_space<smem>>
    %c77 = arith.constant 77 : index
    %122 = memref.load %arg4[%c77] : memref<135xf32, #tpu.memory_space<smem>>
    %c78 = arith.constant 78 : index
    %123 = memref.load %arg4[%c78] : memref<135xf32, #tpu.memory_space<smem>>
    %c79 = arith.constant 79 : index
    %124 = memref.load %arg4[%c79] : memref<135xf32, #tpu.memory_space<smem>>
    %c80 = arith.constant 80 : index
    %125 = memref.load %arg4[%c80] : memref<135xf32, #tpu.memory_space<smem>>
    %c81 = arith.constant 81 : index
    %126 = memref.load %arg4[%c81] : memref<135xf32, #tpu.memory_space<smem>>
    %c82 = arith.constant 82 : index
    %127 = memref.load %arg4[%c82] : memref<135xf32, #tpu.memory_space<smem>>
    %c83 = arith.constant 83 : index
    %128 = memref.load %arg4[%c83] : memref<135xf32, #tpu.memory_space<smem>>
    %c84 = arith.constant 84 : index
    %129 = memref.load %arg4[%c84] : memref<135xf32, #tpu.memory_space<smem>>
    %c85 = arith.constant 85 : index
    %130 = memref.load %arg4[%c85] : memref<135xf32, #tpu.memory_space<smem>>
    %c86 = arith.constant 86 : index
    %131 = memref.load %arg4[%c86] : memref<135xf32, #tpu.memory_space<smem>>
    %c87 = arith.constant 87 : index
    %132 = memref.load %arg4[%c87] : memref<135xf32, #tpu.memory_space<smem>>
    %c88 = arith.constant 88 : index
    %133 = memref.load %arg4[%c88] : memref<135xf32, #tpu.memory_space<smem>>
    %c89 = arith.constant 89 : index
    %134 = memref.load %arg4[%c89] : memref<135xf32, #tpu.memory_space<smem>>
    %c90 = arith.constant 90 : index
    %135 = memref.load %arg4[%c90] : memref<135xf32, #tpu.memory_space<smem>>
    %c91 = arith.constant 91 : index
    %136 = memref.load %arg4[%c91] : memref<135xf32, #tpu.memory_space<smem>>
    %c92 = arith.constant 92 : index
    %137 = memref.load %arg4[%c92] : memref<135xf32, #tpu.memory_space<smem>>
    %c93 = arith.constant 93 : index
    %138 = memref.load %arg4[%c93] : memref<135xf32, #tpu.memory_space<smem>>
    %c94 = arith.constant 94 : index
    %139 = memref.load %arg4[%c94] : memref<135xf32, #tpu.memory_space<smem>>
    %c95 = arith.constant 95 : index
    %140 = memref.load %arg4[%c95] : memref<135xf32, #tpu.memory_space<smem>>
    %c96 = arith.constant 96 : index
    %141 = memref.load %arg4[%c96] : memref<135xf32, #tpu.memory_space<smem>>
    %c97 = arith.constant 97 : index
    %142 = memref.load %arg4[%c97] : memref<135xf32, #tpu.memory_space<smem>>
    %c98 = arith.constant 98 : index
    %143 = memref.load %arg4[%c98] : memref<135xf32, #tpu.memory_space<smem>>
    %c99 = arith.constant 99 : index
    %144 = memref.load %arg4[%c99] : memref<135xf32, #tpu.memory_space<smem>>
    %c100 = arith.constant 100 : index
    %145 = memref.load %arg4[%c100] : memref<135xf32, #tpu.memory_space<smem>>
    %c101 = arith.constant 101 : index
    %146 = memref.load %arg4[%c101] : memref<135xf32, #tpu.memory_space<smem>>
    %c102 = arith.constant 102 : index
    %147 = memref.load %arg4[%c102] : memref<135xf32, #tpu.memory_space<smem>>
    %c103 = arith.constant 103 : index
    %148 = memref.load %arg4[%c103] : memref<135xf32, #tpu.memory_space<smem>>
    %c104 = arith.constant 104 : index
    %149 = memref.load %arg4[%c104] : memref<135xf32, #tpu.memory_space<smem>>
    %c105 = arith.constant 105 : index
    %150 = memref.load %arg4[%c105] : memref<135xf32, #tpu.memory_space<smem>>
    %c106 = arith.constant 106 : index
    %151 = memref.load %arg4[%c106] : memref<135xf32, #tpu.memory_space<smem>>
    %c107 = arith.constant 107 : index
    %152 = memref.load %arg4[%c107] : memref<135xf32, #tpu.memory_space<smem>>
    %c108 = arith.constant 108 : index
    %153 = memref.load %arg4[%c108] : memref<135xf32, #tpu.memory_space<smem>>
    %c109 = arith.constant 109 : index
    %154 = memref.load %arg4[%c109] : memref<135xf32, #tpu.memory_space<smem>>
    %c110 = arith.constant 110 : index
    %155 = memref.load %arg4[%c110] : memref<135xf32, #tpu.memory_space<smem>>
    %c111 = arith.constant 111 : index
    %156 = memref.load %arg4[%c111] : memref<135xf32, #tpu.memory_space<smem>>
    %c112 = arith.constant 112 : index
    %157 = memref.load %arg4[%c112] : memref<135xf32, #tpu.memory_space<smem>>
    %c113 = arith.constant 113 : index
    %158 = memref.load %arg4[%c113] : memref<135xf32, #tpu.memory_space<smem>>
    %c114 = arith.constant 114 : index
    %159 = memref.load %arg4[%c114] : memref<135xf32, #tpu.memory_space<smem>>
    %c115 = arith.constant 115 : index
    %160 = memref.load %arg4[%c115] : memref<135xf32, #tpu.memory_space<smem>>
    %c116 = arith.constant 116 : index
    %161 = memref.load %arg4[%c116] : memref<135xf32, #tpu.memory_space<smem>>
    %c117 = arith.constant 117 : index
    %162 = memref.load %arg4[%c117] : memref<135xf32, #tpu.memory_space<smem>>
    %c118 = arith.constant 118 : index
    %163 = memref.load %arg4[%c118] : memref<135xf32, #tpu.memory_space<smem>>
    %c119 = arith.constant 119 : index
    %164 = memref.load %arg4[%c119] : memref<135xf32, #tpu.memory_space<smem>>
    %c120 = arith.constant 120 : index
    %165 = memref.load %arg4[%c120] : memref<135xf32, #tpu.memory_space<smem>>
    %c121 = arith.constant 121 : index
    %166 = memref.load %arg4[%c121] : memref<135xf32, #tpu.memory_space<smem>>
    %c122 = arith.constant 122 : index
    %167 = memref.load %arg4[%c122] : memref<135xf32, #tpu.memory_space<smem>>
    %c123 = arith.constant 123 : index
    %168 = memref.load %arg4[%c123] : memref<135xf32, #tpu.memory_space<smem>>
    %c124 = arith.constant 124 : index
    %169 = memref.load %arg4[%c124] : memref<135xf32, #tpu.memory_space<smem>>
    %c125 = arith.constant 125 : index
    %170 = memref.load %arg4[%c125] : memref<135xf32, #tpu.memory_space<smem>>
    %c126 = arith.constant 126 : index
    %171 = memref.load %arg4[%c126] : memref<135xf32, #tpu.memory_space<smem>>
    %c127 = arith.constant 127 : index
    %172 = memref.load %arg4[%c127] : memref<135xf32, #tpu.memory_space<smem>>
    %c128 = arith.constant 128 : index
    %173 = memref.load %arg4[%c128] : memref<135xf32, #tpu.memory_space<smem>>
    %c129 = arith.constant 129 : index
    %174 = memref.load %arg4[%c129] : memref<135xf32, #tpu.memory_space<smem>>
    %c130 = arith.constant 130 : index
    %175 = memref.load %arg4[%c130] : memref<135xf32, #tpu.memory_space<smem>>
    %c131 = arith.constant 131 : index
    %176 = memref.load %arg4[%c131] : memref<135xf32, #tpu.memory_space<smem>>
    %c132 = arith.constant 132 : index
    %177 = memref.load %arg4[%c132] : memref<135xf32, #tpu.memory_space<smem>>
    %c133 = arith.constant 133 : index
    %178 = memref.load %arg4[%c133] : memref<135xf32, #tpu.memory_space<smem>>
    %c134 = arith.constant 134 : index
    %179 = memref.load %arg4[%c134] : memref<135xf32, #tpu.memory_space<smem>>
    %c0_60 = arith.constant 0 : index
    %180 = memref.load %arg5[%c0_60] : memref<5xf32, #tpu.memory_space<smem>>
    %c1_61 = arith.constant 1 : index
    %181 = memref.load %arg5[%c1_61] : memref<5xf32, #tpu.memory_space<smem>>
    %c2_62 = arith.constant 2 : index
    %182 = memref.load %arg5[%c2_62] : memref<5xf32, #tpu.memory_space<smem>>
    %c3_63 = arith.constant 3 : index
    %183 = memref.load %arg5[%c3_63] : memref<5xf32, #tpu.memory_space<smem>>
    %c4_64 = arith.constant 4 : index
    %184 = memref.load %arg5[%c4_64] : memref<5xf32, #tpu.memory_space<smem>>
    %c0_65 = arith.constant 0 : index
    %185 = memref.load %arg6[%c0_65] : memref<15xf32, #tpu.memory_space<smem>>
    %c1_66 = arith.constant 1 : index
    %186 = memref.load %arg6[%c1_66] : memref<15xf32, #tpu.memory_space<smem>>
    %c2_67 = arith.constant 2 : index
    %187 = memref.load %arg6[%c2_67] : memref<15xf32, #tpu.memory_space<smem>>
    %c3_68 = arith.constant 3 : index
    %188 = memref.load %arg6[%c3_68] : memref<15xf32, #tpu.memory_space<smem>>
    %c4_69 = arith.constant 4 : index
    %189 = memref.load %arg6[%c4_69] : memref<15xf32, #tpu.memory_space<smem>>
    %c5_70 = arith.constant 5 : index
    %190 = memref.load %arg6[%c5_70] : memref<15xf32, #tpu.memory_space<smem>>
    %c6_71 = arith.constant 6 : index
    %191 = memref.load %arg6[%c6_71] : memref<15xf32, #tpu.memory_space<smem>>
    %c7_72 = arith.constant 7 : index
    %192 = memref.load %arg6[%c7_72] : memref<15xf32, #tpu.memory_space<smem>>
    %c8_73 = arith.constant 8 : index
    %193 = memref.load %arg6[%c8_73] : memref<15xf32, #tpu.memory_space<smem>>
    %c9_74 = arith.constant 9 : index
    %194 = memref.load %arg6[%c9_74] : memref<15xf32, #tpu.memory_space<smem>>
    %c10_75 = arith.constant 10 : index
    %195 = memref.load %arg6[%c10_75] : memref<15xf32, #tpu.memory_space<smem>>
    %c11_76 = arith.constant 11 : index
    %196 = memref.load %arg6[%c11_76] : memref<15xf32, #tpu.memory_space<smem>>
    %c12_77 = arith.constant 12 : index
    %197 = memref.load %arg6[%c12_77] : memref<15xf32, #tpu.memory_space<smem>>
    %c13_78 = arith.constant 13 : index
    %198 = memref.load %arg6[%c13_78] : memref<15xf32, #tpu.memory_space<smem>>
    %c14_79 = arith.constant 14 : index
    %199 = memref.load %arg6[%c14_79] : memref<15xf32, #tpu.memory_space<smem>>
    %c0_80 = arith.constant 0 : index
    %200 = memref.load %arg7[%c0_80] : memref<3xf32, #tpu.memory_space<smem>>
    %c1_81 = arith.constant 1 : index
    %201 = memref.load %arg7[%c1_81] : memref<3xf32, #tpu.memory_space<smem>>
    %c2_82 = arith.constant 2 : index
    %202 = memref.load %arg7[%c2_82] : memref<3xf32, #tpu.memory_space<smem>>
    %c0_i32 = arith.constant 0 : i32
    %c8_i32 = arith.constant 8 : i32
    %203 = arith.muli %c0_i32, %c8_i32 : i32
    %204 = tpu.assume_multiple %203, 8 : i32
    %c0_i32_83 = arith.constant 0 : i32
    %205 = arith.addi %204, %c0_i32_83 : i32
    %c0_84 = arith.constant 0 : index
    %206 = arith.index_cast %205 : i32 to index
    %c0_85 = arith.constant 0 : index
    %207 = vector.load %arg9[%c0_84, %206, %c0_85] : memref<3x10x128xf32, #tpu.memory_space<vmem>>, vector<1x8x128xf32>
    %208 = vector.shape_cast %207 : vector<1x8x128xf32> to vector<8x128xf32>
    %c1_i32 = arith.constant 1 : i32
    %209 = tpu.dynamic_rotate %208 by %c1_i32 dim 1 : vector<8x128xf32>, i32 -> vector<8x128xf32>
    %c127_i32 = arith.constant 127 : i32
    %210 = tpu.dynamic_rotate %208 by %c127_i32 dim 1 : vector<8x128xf32>, i32 -> vector<8x128xf32>
    %211 = vector.broadcast %45 : f32 to vector<8x128xf32>
    %212 = arith.mulf %211, %209 : vector<8x128xf32>
    %213 = vector.broadcast %72 : f32 to vector<8x128xf32>
    %214 = arith.mulf %213, %209 : vector<8x128xf32>
    %215 = vector.broadcast %99 : f32 to vector<8x128xf32>
    %216 = arith.mulf %215, %209 : vector<8x128xf32>
    %217 = vector.broadcast %126 : f32 to vector<8x128xf32>
    %218 = arith.mulf %217, %209 : vector<8x128xf32>
    %219 = vector.broadcast %153 : f32 to vector<8x128xf32>
    %220 = arith.mulf %219, %209 : vector<8x128xf32>
    %221 = vector.broadcast %46 : f32 to vector<8x128xf32>
    %222 = arith.mulf %221, %208 : vector<8x128xf32>
    %223 = arith.addf %212, %222 : vector<8x128xf32>
    %224 = vector.broadcast %73 : f32 to vector<8x128xf32>
    %225 = arith.mulf %224, %208 : vector<8x128xf32>
    %226 = arith.addf %214, %225 : vector<8x128xf32>
    %227 = vector.broadcast %100 : f32 to vector<8x128xf32>
    %228 = arith.mulf %227, %208 : vector<8x128xf32>
    %229 = arith.addf %216, %228 : vector<8x128xf32>
    %230 = vector.broadcast %127 : f32 to vector<8x128xf32>
    %231 = arith.mulf %230, %208 : vector<8x128xf32>
    %232 = arith.addf %218, %231 : vector<8x128xf32>
    %233 = vector.broadcast %154 : f32 to vector<8x128xf32>
    %234 = arith.mulf %233, %208 : vector<8x128xf32>
    %235 = arith.addf %220, %234 : vector<8x128xf32>
    %236 = vector.broadcast %47 : f32 to vector<8x128xf32>
    %237 = arith.mulf %236, %210 : vector<8x128xf32>
    %238 = arith.addf %223, %237 : vector<8x128xf32>
    %239 = vector.broadcast %74 : f32 to vector<8x128xf32>
    %240 = arith.mulf %239, %210 : vector<8x128xf32>
    %241 = arith.addf %226, %240 : vector<8x128xf32>
    %242 = vector.broadcast %101 : f32 to vector<8x128xf32>
    %243 = arith.mulf %242, %210 : vector<8x128xf32>
    %244 = arith.addf %229, %243 : vector<8x128xf32>
    %245 = vector.broadcast %128 : f32 to vector<8x128xf32>
    %246 = arith.mulf %245, %210 : vector<8x128xf32>
    %247 = arith.addf %232, %246 : vector<8x128xf32>
    %248 = vector.broadcast %155 : f32 to vector<8x128xf32>
    %249 = arith.mulf %248, %210 : vector<8x128xf32>
    %250 = arith.addf %235, %249 : vector<8x128xf32>
    %c0_86 = arith.constant 0 : index
    %251 = arith.index_cast %204 : i32 to index
    %c0_87 = arith.constant 0 : index
    %252 = vector.load %arg1[%c0_86, %251, %c0_87] : memref<3x8x128xf32, #tpu.memory_space<vmem>>, vector<1x8x128xf32>
    %253 = vector.shape_cast %252 : vector<1x8x128xf32> to vector<8x128xf32>
    %c1_i32_88 = arith.constant 1 : i32
    %254 = tpu.dynamic_rotate %253 by %c1_i32_88 dim 1 : vector<8x128xf32>, i32 -> vector<8x128xf32>
    %c127_i32_89 = arith.constant 127 : i32
    %255 = tpu.dynamic_rotate %253 by %c127_i32_89 dim 1 : vector<8x128xf32>, i32 -> vector<8x128xf32>
    %256 = vector.broadcast %48 : f32 to vector<8x128xf32>
    %257 = arith.mulf %256, %254 : vector<8x128xf32>
    %258 = arith.addf %238, %257 : vector<8x128xf32>
    %259 = vector.broadcast %75 : f32 to vector<8x128xf32>
    %260 = arith.mulf %259, %254 : vector<8x128xf32>
    %261 = arith.addf %241, %260 : vector<8x128xf32>
    %262 = vector.broadcast %102 : f32 to vector<8x128xf32>
    %263 = arith.mulf %262, %254 : vector<8x128xf32>
    %264 = arith.addf %244, %263 : vector<8x128xf32>
    %265 = vector.broadcast %129 : f32 to vector<8x128xf32>
    %266 = arith.mulf %265, %254 : vector<8x128xf32>
    %267 = arith.addf %247, %266 : vector<8x128xf32>
    %268 = vector.broadcast %156 : f32 to vector<8x128xf32>
    %269 = arith.mulf %268, %254 : vector<8x128xf32>
    %270 = arith.addf %250, %269 : vector<8x128xf32>
    %271 = vector.broadcast %49 : f32 to vector<8x128xf32>
    %272 = arith.mulf %271, %253 : vector<8x128xf32>
    %273 = arith.addf %258, %272 : vector<8x128xf32>
    %274 = vector.broadcast %76 : f32 to vector<8x128xf32>
    %275 = arith.mulf %274, %253 : vector<8x128xf32>
    %276 = arith.addf %261, %275 : vector<8x128xf32>
    %277 = vector.broadcast %103 : f32 to vector<8x128xf32>
    %278 = arith.mulf %277, %253 : vector<8x128xf32>
    %279 = arith.addf %264, %278 : vector<8x128xf32>
    %280 = vector.broadcast %130 : f32 to vector<8x128xf32>
    %281 = arith.mulf %280, %253 : vector<8x128xf32>
    %282 = arith.addf %267, %281 : vector<8x128xf32>
    %283 = vector.broadcast %157 : f32 to vector<8x128xf32>
    %284 = arith.mulf %283, %253 : vector<8x128xf32>
    %285 = arith.addf %270, %284 : vector<8x128xf32>
    %286 = vector.broadcast %50 : f32 to vector<8x128xf32>
    %287 = arith.mulf %286, %255 : vector<8x128xf32>
    %288 = arith.addf %273, %287 : vector<8x128xf32>
    %289 = vector.broadcast %77 : f32 to vector<8x128xf32>
    %290 = arith.mulf %289, %255 : vector<8x128xf32>
    %291 = arith.addf %276, %290 : vector<8x128xf32>
    %292 = vector.broadcast %104 : f32 to vector<8x128xf32>
    %293 = arith.mulf %292, %255 : vector<8x128xf32>
    %294 = arith.addf %279, %293 : vector<8x128xf32>
    %295 = vector.broadcast %131 : f32 to vector<8x128xf32>
    %296 = arith.mulf %295, %255 : vector<8x128xf32>
    %297 = arith.addf %282, %296 : vector<8x128xf32>
    %298 = vector.broadcast %158 : f32 to vector<8x128xf32>
    %299 = arith.mulf %298, %255 : vector<8x128xf32>
    %300 = arith.addf %285, %299 : vector<8x128xf32>
    %c2_i32 = arith.constant 2 : i32
    %301 = arith.addi %204, %c2_i32 : i32
    %c0_90 = arith.constant 0 : index
    %302 = arith.index_cast %301 : i32 to index
    %c0_91 = arith.constant 0 : index
    %303 = vector.load %arg9[%c0_90, %302, %c0_91] : memref<3x10x128xf32, #tpu.memory_space<vmem>>, vector<1x8x128xf32>
    %304 = vector.shape_cast %303 : vector<1x8x128xf32> to vector<8x128xf32>
    %c1_i32_92 = arith.constant 1 : i32
    %305 = tpu.dynamic_rotate %304 by %c1_i32_92 dim 1 : vector<8x128xf32>, i32 -> vector<8x128xf32>
    %c127_i32_93 = arith.constant 127 : i32
    %306 = tpu.dynamic_rotate %304 by %c127_i32_93 dim 1 : vector<8x128xf32>, i32 -> vector<8x128xf32>
    %307 = vector.broadcast %51 : f32 to vector<8x128xf32>
    %308 = arith.mulf %307, %305 : vector<8x128xf32>
    %309 = arith.addf %288, %308 : vector<8x128xf32>
    %310 = vector.broadcast %78 : f32 to vector<8x128xf32>
    %311 = arith.mulf %310, %305 : vector<8x128xf32>
    %312 = arith.addf %291, %311 : vector<8x128xf32>
    %313 = vector.broadcast %105 : f32 to vector<8x128xf32>
    %314 = arith.mulf %313, %305 : vector<8x128xf32>
    %315 = arith.addf %294, %314 : vector<8x128xf32>
    %316 = vector.broadcast %132 : f32 to vector<8x128xf32>
    %317 = arith.mulf %316, %305 : vector<8x128xf32>
    %318 = arith.addf %297, %317 : vector<8x128xf32>
    %319 = vector.broadcast %159 : f32 to vector<8x128xf32>
    %320 = arith.mulf %319, %305 : vector<8x128xf32>
    %321 = arith.addf %300, %320 : vector<8x128xf32>
    %322 = vector.broadcast %52 : f32 to vector<8x128xf32>
    %323 = arith.mulf %322, %304 : vector<8x128xf32>
    %324 = arith.addf %309, %323 : vector<8x128xf32>
    %325 = vector.broadcast %79 : f32 to vector<8x128xf32>
    %326 = arith.mulf %325, %304 : vector<8x128xf32>
    %327 = arith.addf %312, %326 : vector<8x128xf32>
    %328 = vector.broadcast %106 : f32 to vector<8x128xf32>
    %329 = arith.mulf %328, %304 : vector<8x128xf32>
    %330 = arith.addf %315, %329 : vector<8x128xf32>
    %331 = vector.broadcast %133 : f32 to vector<8x128xf32>
    %332 = arith.mulf %331, %304 : vector<8x128xf32>
    %333 = arith.addf %318, %332 : vector<8x128xf32>
    %334 = vector.broadcast %160 : f32 to vector<8x128xf32>
    %335 = arith.mulf %334, %304 : vector<8x128xf32>
    %336 = arith.addf %321, %335 : vector<8x128xf32>
    %337 = vector.broadcast %53 : f32 to vector<8x128xf32>
    %338 = arith.mulf %337, %306 : vector<8x128xf32>
    %339 = arith.addf %324, %338 : vector<8x128xf32>
    %340 = vector.broadcast %80 : f32 to vector<8x128xf32>
    %341 = arith.mulf %340, %306 : vector<8x128xf32>
    %342 = arith.addf %327, %341 : vector<8x128xf32>
    %343 = vector.broadcast %107 : f32 to vector<8x128xf32>
    %344 = arith.mulf %343, %306 : vector<8x128xf32>
    %345 = arith.addf %330, %344 : vector<8x128xf32>
    %346 = vector.broadcast %134 : f32 to vector<8x128xf32>
    %347 = arith.mulf %346, %306 : vector<8x128xf32>
    %348 = arith.addf %333, %347 : vector<8x128xf32>
    %349 = vector.broadcast %161 : f32 to vector<8x128xf32>
    %350 = arith.mulf %349, %306 : vector<8x128xf32>
    %351 = arith.addf %336, %350 : vector<8x128xf32>
    %c0_i32_94 = arith.constant 0 : i32
    %352 = arith.addi %204, %c0_i32_94 : i32
    %c1_95 = arith.constant 1 : index
    %353 = arith.index_cast %352 : i32 to index
    %c0_96 = arith.constant 0 : index
    %354 = vector.load %arg9[%c1_95, %353, %c0_96] : memref<3x10x128xf32, #tpu.memory_space<vmem>>, vector<1x8x128xf32>
    %355 = vector.shape_cast %354 : vector<1x8x128xf32> to vector<8x128xf32>
    %c1_i32_97 = arith.constant 1 : i32
    %356 = tpu.dynamic_rotate %355 by %c1_i32_97 dim 1 : vector<8x128xf32>, i32 -> vector<8x128xf32>
    %c127_i32_98 = arith.constant 127 : i32
    %357 = tpu.dynamic_rotate %355 by %c127_i32_98 dim 1 : vector<8x128xf32>, i32 -> vector<8x128xf32>
    %358 = vector.broadcast %54 : f32 to vector<8x128xf32>
    %359 = arith.mulf %358, %356 : vector<8x128xf32>
    %360 = arith.addf %339, %359 : vector<8x128xf32>
    %361 = vector.broadcast %81 : f32 to vector<8x128xf32>
    %362 = arith.mulf %361, %356 : vector<8x128xf32>
    %363 = arith.addf %342, %362 : vector<8x128xf32>
    %364 = vector.broadcast %108 : f32 to vector<8x128xf32>
    %365 = arith.mulf %364, %356 : vector<8x128xf32>
    %366 = arith.addf %345, %365 : vector<8x128xf32>
    %367 = vector.broadcast %135 : f32 to vector<8x128xf32>
    %368 = arith.mulf %367, %356 : vector<8x128xf32>
    %369 = arith.addf %348, %368 : vector<8x128xf32>
    %370 = vector.broadcast %162 : f32 to vector<8x128xf32>
    %371 = arith.mulf %370, %356 : vector<8x128xf32>
    %372 = arith.addf %351, %371 : vector<8x128xf32>
    %373 = vector.broadcast %55 : f32 to vector<8x128xf32>
    %374 = arith.mulf %373, %355 : vector<8x128xf32>
    %375 = arith.addf %360, %374 : vector<8x128xf32>
    %376 = vector.broadcast %82 : f32 to vector<8x128xf32>
    %377 = arith.mulf %376, %355 : vector<8x128xf32>
    %378 = arith.addf %363, %377 : vector<8x128xf32>
    %379 = vector.broadcast %109 : f32 to vector<8x128xf32>
    %380 = arith.mulf %379, %355 : vector<8x128xf32>
    %381 = arith.addf %366, %380 : vector<8x128xf32>
    %382 = vector.broadcast %136 : f32 to vector<8x128xf32>
    %383 = arith.mulf %382, %355 : vector<8x128xf32>
    %384 = arith.addf %369, %383 : vector<8x128xf32>
    %385 = vector.broadcast %163 : f32 to vector<8x128xf32>
    %386 = arith.mulf %385, %355 : vector<8x128xf32>
    %387 = arith.addf %372, %386 : vector<8x128xf32>
    %388 = vector.broadcast %56 : f32 to vector<8x128xf32>
    %389 = arith.mulf %388, %357 : vector<8x128xf32>
    %390 = arith.addf %375, %389 : vector<8x128xf32>
    %391 = vector.broadcast %83 : f32 to vector<8x128xf32>
    %392 = arith.mulf %391, %357 : vector<8x128xf32>
    %393 = arith.addf %378, %392 : vector<8x128xf32>
    %394 = vector.broadcast %110 : f32 to vector<8x128xf32>
    %395 = arith.mulf %394, %357 : vector<8x128xf32>
    %396 = arith.addf %381, %395 : vector<8x128xf32>
    %397 = vector.broadcast %137 : f32 to vector<8x128xf32>
    %398 = arith.mulf %397, %357 : vector<8x128xf32>
    %399 = arith.addf %384, %398 : vector<8x128xf32>
    %400 = vector.broadcast %164 : f32 to vector<8x128xf32>
    %401 = arith.mulf %400, %357 : vector<8x128xf32>
    %402 = arith.addf %387, %401 : vector<8x128xf32>
    %c1_99 = arith.constant 1 : index
    %403 = arith.index_cast %204 : i32 to index
    %c0_100 = arith.constant 0 : index
    %404 = vector.load %arg1[%c1_99, %403, %c0_100] : memref<3x8x128xf32, #tpu.memory_space<vmem>>, vector<1x8x128xf32>
    %405 = vector.shape_cast %404 : vector<1x8x128xf32> to vector<8x128xf32>
    %c1_i32_101 = arith.constant 1 : i32
    %406 = tpu.dynamic_rotate %405 by %c1_i32_101 dim 1 : vector<8x128xf32>, i32 -> vector<8x128xf32>
    %c127_i32_102 = arith.constant 127 : i32
    %407 = tpu.dynamic_rotate %405 by %c127_i32_102 dim 1 : vector<8x128xf32>, i32 -> vector<8x128xf32>
    %408 = vector.broadcast %57 : f32 to vector<8x128xf32>
    %409 = arith.mulf %408, %406 : vector<8x128xf32>
    %410 = arith.addf %390, %409 : vector<8x128xf32>
    %411 = vector.broadcast %84 : f32 to vector<8x128xf32>
    %412 = arith.mulf %411, %406 : vector<8x128xf32>
    %413 = arith.addf %393, %412 : vector<8x128xf32>
    %414 = vector.broadcast %111 : f32 to vector<8x128xf32>
    %415 = arith.mulf %414, %406 : vector<8x128xf32>
    %416 = arith.addf %396, %415 : vector<8x128xf32>
    %417 = vector.broadcast %138 : f32 to vector<8x128xf32>
    %418 = arith.mulf %417, %406 : vector<8x128xf32>
    %419 = arith.addf %399, %418 : vector<8x128xf32>
    %420 = vector.broadcast %165 : f32 to vector<8x128xf32>
    %421 = arith.mulf %420, %406 : vector<8x128xf32>
    %422 = arith.addf %402, %421 : vector<8x128xf32>
    %423 = vector.broadcast %58 : f32 to vector<8x128xf32>
    %424 = arith.mulf %423, %405 : vector<8x128xf32>
    %425 = arith.addf %410, %424 : vector<8x128xf32>
    %426 = vector.broadcast %85 : f32 to vector<8x128xf32>
    %427 = arith.mulf %426, %405 : vector<8x128xf32>
    %428 = arith.addf %413, %427 : vector<8x128xf32>
    %429 = vector.broadcast %112 : f32 to vector<8x128xf32>
    %430 = arith.mulf %429, %405 : vector<8x128xf32>
    %431 = arith.addf %416, %430 : vector<8x128xf32>
    %432 = vector.broadcast %139 : f32 to vector<8x128xf32>
    %433 = arith.mulf %432, %405 : vector<8x128xf32>
    %434 = arith.addf %419, %433 : vector<8x128xf32>
    %435 = vector.broadcast %166 : f32 to vector<8x128xf32>
    %436 = arith.mulf %435, %405 : vector<8x128xf32>
    %437 = arith.addf %422, %436 : vector<8x128xf32>
    %438 = vector.broadcast %59 : f32 to vector<8x128xf32>
    %439 = arith.mulf %438, %407 : vector<8x128xf32>
    %440 = arith.addf %425, %439 : vector<8x128xf32>
    %441 = vector.broadcast %86 : f32 to vector<8x128xf32>
    %442 = arith.mulf %441, %407 : vector<8x128xf32>
    %443 = arith.addf %428, %442 : vector<8x128xf32>
    %444 = vector.broadcast %113 : f32 to vector<8x128xf32>
    %445 = arith.mulf %444, %407 : vector<8x128xf32>
    %446 = arith.addf %431, %445 : vector<8x128xf32>
    %447 = vector.broadcast %140 : f32 to vector<8x128xf32>
    %448 = arith.mulf %447, %407 : vector<8x128xf32>
    %449 = arith.addf %434, %448 : vector<8x128xf32>
    %450 = vector.broadcast %167 : f32 to vector<8x128xf32>
    %451 = arith.mulf %450, %407 : vector<8x128xf32>
    %452 = arith.addf %437, %451 : vector<8x128xf32>
    %c2_i32_103 = arith.constant 2 : i32
    %453 = arith.addi %204, %c2_i32_103 : i32
    %c1_104 = arith.constant 1 : index
    %454 = arith.index_cast %453 : i32 to index
    %c0_105 = arith.constant 0 : index
    %455 = vector.load %arg9[%c1_104, %454, %c0_105] : memref<3x10x128xf32, #tpu.memory_space<vmem>>, vector<1x8x128xf32>
    %456 = vector.shape_cast %455 : vector<1x8x128xf32> to vector<8x128xf32>
    %c1_i32_106 = arith.constant 1 : i32
    %457 = tpu.dynamic_rotate %456 by %c1_i32_106 dim 1 : vector<8x128xf32>, i32 -> vector<8x128xf32>
    %c127_i32_107 = arith.constant 127 : i32
    %458 = tpu.dynamic_rotate %456 by %c127_i32_107 dim 1 : vector<8x128xf32>, i32 -> vector<8x128xf32>
    %459 = vector.broadcast %60 : f32 to vector<8x128xf32>
    %460 = arith.mulf %459, %457 : vector<8x128xf32>
    %461 = arith.addf %440, %460 : vector<8x128xf32>
    %462 = vector.broadcast %87 : f32 to vector<8x128xf32>
    %463 = arith.mulf %462, %457 : vector<8x128xf32>
    %464 = arith.addf %443, %463 : vector<8x128xf32>
    %465 = vector.broadcast %114 : f32 to vector<8x128xf32>
    %466 = arith.mulf %465, %457 : vector<8x128xf32>
    %467 = arith.addf %446, %466 : vector<8x128xf32>
    %468 = vector.broadcast %141 : f32 to vector<8x128xf32>
    %469 = arith.mulf %468, %457 : vector<8x128xf32>
    %470 = arith.addf %449, %469 : vector<8x128xf32>
    %471 = vector.broadcast %168 : f32 to vector<8x128xf32>
    %472 = arith.mulf %471, %457 : vector<8x128xf32>
    %473 = arith.addf %452, %472 : vector<8x128xf32>
    %474 = vector.broadcast %61 : f32 to vector<8x128xf32>
    %475 = arith.mulf %474, %456 : vector<8x128xf32>
    %476 = arith.addf %461, %475 : vector<8x128xf32>
    %477 = vector.broadcast %88 : f32 to vector<8x128xf32>
    %478 = arith.mulf %477, %456 : vector<8x128xf32>
    %479 = arith.addf %464, %478 : vector<8x128xf32>
    %480 = vector.broadcast %115 : f32 to vector<8x128xf32>
    %481 = arith.mulf %480, %456 : vector<8x128xf32>
    %482 = arith.addf %467, %481 : vector<8x128xf32>
    %483 = vector.broadcast %142 : f32 to vector<8x128xf32>
    %484 = arith.mulf %483, %456 : vector<8x128xf32>
    %485 = arith.addf %470, %484 : vector<8x128xf32>
    %486 = vector.broadcast %169 : f32 to vector<8x128xf32>
    %487 = arith.mulf %486, %456 : vector<8x128xf32>
    %488 = arith.addf %473, %487 : vector<8x128xf32>
    %489 = vector.broadcast %62 : f32 to vector<8x128xf32>
    %490 = arith.mulf %489, %458 : vector<8x128xf32>
    %491 = arith.addf %476, %490 : vector<8x128xf32>
    %492 = vector.broadcast %89 : f32 to vector<8x128xf32>
    %493 = arith.mulf %492, %458 : vector<8x128xf32>
    %494 = arith.addf %479, %493 : vector<8x128xf32>
    %495 = vector.broadcast %116 : f32 to vector<8x128xf32>
    %496 = arith.mulf %495, %458 : vector<8x128xf32>
    %497 = arith.addf %482, %496 : vector<8x128xf32>
    %498 = vector.broadcast %143 : f32 to vector<8x128xf32>
    %499 = arith.mulf %498, %458 : vector<8x128xf32>
    %500 = arith.addf %485, %499 : vector<8x128xf32>
    %501 = vector.broadcast %170 : f32 to vector<8x128xf32>
    %502 = arith.mulf %501, %458 : vector<8x128xf32>
    %503 = arith.addf %488, %502 : vector<8x128xf32>
    %c0_i32_108 = arith.constant 0 : i32
    %504 = arith.addi %204, %c0_i32_108 : i32
    %c2_109 = arith.constant 2 : index
    %505 = arith.index_cast %504 : i32 to index
    %c0_110 = arith.constant 0 : index
    %506 = vector.load %arg9[%c2_109, %505, %c0_110] : memref<3x10x128xf32, #tpu.memory_space<vmem>>, vector<1x8x128xf32>
    %507 = vector.shape_cast %506 : vector<1x8x128xf32> to vector<8x128xf32>
    %c1_i32_111 = arith.constant 1 : i32
    %508 = tpu.dynamic_rotate %507 by %c1_i32_111 dim 1 : vector<8x128xf32>, i32 -> vector<8x128xf32>
    %c127_i32_112 = arith.constant 127 : i32
    %509 = tpu.dynamic_rotate %507 by %c127_i32_112 dim 1 : vector<8x128xf32>, i32 -> vector<8x128xf32>
    %510 = vector.broadcast %63 : f32 to vector<8x128xf32>
    %511 = arith.mulf %510, %508 : vector<8x128xf32>
    %512 = arith.addf %491, %511 : vector<8x128xf32>
    %513 = vector.broadcast %90 : f32 to vector<8x128xf32>
    %514 = arith.mulf %513, %508 : vector<8x128xf32>
    %515 = arith.addf %494, %514 : vector<8x128xf32>
    %516 = vector.broadcast %117 : f32 to vector<8x128xf32>
    %517 = arith.mulf %516, %508 : vector<8x128xf32>
    %518 = arith.addf %497, %517 : vector<8x128xf32>
    %519 = vector.broadcast %144 : f32 to vector<8x128xf32>
    %520 = arith.mulf %519, %508 : vector<8x128xf32>
    %521 = arith.addf %500, %520 : vector<8x128xf32>
    %522 = vector.broadcast %171 : f32 to vector<8x128xf32>
    %523 = arith.mulf %522, %508 : vector<8x128xf32>
    %524 = arith.addf %503, %523 : vector<8x128xf32>
    %525 = vector.broadcast %64 : f32 to vector<8x128xf32>
    %526 = arith.mulf %525, %507 : vector<8x128xf32>
    %527 = arith.addf %512, %526 : vector<8x128xf32>
    %528 = vector.broadcast %91 : f32 to vector<8x128xf32>
    %529 = arith.mulf %528, %507 : vector<8x128xf32>
    %530 = arith.addf %515, %529 : vector<8x128xf32>
    %531 = vector.broadcast %118 : f32 to vector<8x128xf32>
    %532 = arith.mulf %531, %507 : vector<8x128xf32>
    %533 = arith.addf %518, %532 : vector<8x128xf32>
    %534 = vector.broadcast %145 : f32 to vector<8x128xf32>
    %535 = arith.mulf %534, %507 : vector<8x128xf32>
    %536 = arith.addf %521, %535 : vector<8x128xf32>
    %537 = vector.broadcast %172 : f32 to vector<8x128xf32>
    %538 = arith.mulf %537, %507 : vector<8x128xf32>
    %539 = arith.addf %524, %538 : vector<8x128xf32>
    %540 = vector.broadcast %65 : f32 to vector<8x128xf32>
    %541 = arith.mulf %540, %509 : vector<8x128xf32>
    %542 = arith.addf %527, %541 : vector<8x128xf32>
    %543 = vector.broadcast %92 : f32 to vector<8x128xf32>
    %544 = arith.mulf %543, %509 : vector<8x128xf32>
    %545 = arith.addf %530, %544 : vector<8x128xf32>
    %546 = vector.broadcast %119 : f32 to vector<8x128xf32>
    %547 = arith.mulf %546, %509 : vector<8x128xf32>
    %548 = arith.addf %533, %547 : vector<8x128xf32>
    %549 = vector.broadcast %146 : f32 to vector<8x128xf32>
    %550 = arith.mulf %549, %509 : vector<8x128xf32>
    %551 = arith.addf %536, %550 : vector<8x128xf32>
    %552 = vector.broadcast %173 : f32 to vector<8x128xf32>
    %553 = arith.mulf %552, %509 : vector<8x128xf32>
    %554 = arith.addf %539, %553 : vector<8x128xf32>
    %c2_113 = arith.constant 2 : index
    %555 = arith.index_cast %204 : i32 to index
    %c0_114 = arith.constant 0 : index
    %556 = vector.load %arg1[%c2_113, %555, %c0_114] : memref<3x8x128xf32, #tpu.memory_space<vmem>>, vector<1x8x128xf32>
    %557 = vector.shape_cast %556 : vector<1x8x128xf32> to vector<8x128xf32>
    %c1_i32_115 = arith.constant 1 : i32
    %558 = tpu.dynamic_rotate %557 by %c1_i32_115 dim 1 : vector<8x128xf32>, i32 -> vector<8x128xf32>
    %c127_i32_116 = arith.constant 127 : i32
    %559 = tpu.dynamic_rotate %557 by %c127_i32_116 dim 1 : vector<8x128xf32>, i32 -> vector<8x128xf32>
    %560 = vector.broadcast %66 : f32 to vector<8x128xf32>
    %561 = arith.mulf %560, %558 : vector<8x128xf32>
    %562 = arith.addf %542, %561 : vector<8x128xf32>
    %563 = vector.broadcast %93 : f32 to vector<8x128xf32>
    %564 = arith.mulf %563, %558 : vector<8x128xf32>
    %565 = arith.addf %545, %564 : vector<8x128xf32>
    %566 = vector.broadcast %120 : f32 to vector<8x128xf32>
    %567 = arith.mulf %566, %558 : vector<8x128xf32>
    %568 = arith.addf %548, %567 : vector<8x128xf32>
    %569 = vector.broadcast %147 : f32 to vector<8x128xf32>
    %570 = arith.mulf %569, %558 : vector<8x128xf32>
    %571 = arith.addf %551, %570 : vector<8x128xf32>
    %572 = vector.broadcast %174 : f32 to vector<8x128xf32>
    %573 = arith.mulf %572, %558 : vector<8x128xf32>
    %574 = arith.addf %554, %573 : vector<8x128xf32>
    %575 = vector.broadcast %67 : f32 to vector<8x128xf32>
    %576 = arith.mulf %575, %557 : vector<8x128xf32>
    %577 = arith.addf %562, %576 : vector<8x128xf32>
    %578 = vector.broadcast %94 : f32 to vector<8x128xf32>
    %579 = arith.mulf %578, %557 : vector<8x128xf32>
    %580 = arith.addf %565, %579 : vector<8x128xf32>
    %581 = vector.broadcast %121 : f32 to vector<8x128xf32>
    %582 = arith.mulf %581, %557 : vector<8x128xf32>
    %583 = arith.addf %568, %582 : vector<8x128xf32>
    %584 = vector.broadcast %148 : f32 to vector<8x128xf32>
    %585 = arith.mulf %584, %557 : vector<8x128xf32>
    %586 = arith.addf %571, %585 : vector<8x128xf32>
    %587 = vector.broadcast %175 : f32 to vector<8x128xf32>
    %588 = arith.mulf %587, %557 : vector<8x128xf32>
    %589 = arith.addf %574, %588 : vector<8x128xf32>
    %590 = vector.broadcast %68 : f32 to vector<8x128xf32>
    %591 = arith.mulf %590, %559 : vector<8x128xf32>
    %592 = arith.addf %577, %591 : vector<8x128xf32>
    %593 = vector.broadcast %95 : f32 to vector<8x128xf32>
    %594 = arith.mulf %593, %559 : vector<8x128xf32>
    %595 = arith.addf %580, %594 : vector<8x128xf32>
    %596 = vector.broadcast %122 : f32 to vector<8x128xf32>
    %597 = arith.mulf %596, %559 : vector<8x128xf32>
    %598 = arith.addf %583, %597 : vector<8x128xf32>
    %599 = vector.broadcast %149 : f32 to vector<8x128xf32>
    %600 = arith.mulf %599, %559 : vector<8x128xf32>
    %601 = arith.addf %586, %600 : vector<8x128xf32>
    %602 = vector.broadcast %176 : f32 to vector<8x128xf32>
    %603 = arith.mulf %602, %559 : vector<8x128xf32>
    %604 = arith.addf %589, %603 : vector<8x128xf32>
    %c2_i32_117 = arith.constant 2 : i32
    %605 = arith.addi %204, %c2_i32_117 : i32
    %c2_118 = arith.constant 2 : index
    %606 = arith.index_cast %605 : i32 to index
    %c0_119 = arith.constant 0 : index
    %607 = vector.load %arg9[%c2_118, %606, %c0_119] : memref<3x10x128xf32, #tpu.memory_space<vmem>>, vector<1x8x128xf32>
    %608 = vector.shape_cast %607 : vector<1x8x128xf32> to vector<8x128xf32>
    %c1_i32_120 = arith.constant 1 : i32
    %609 = tpu.dynamic_rotate %608 by %c1_i32_120 dim 1 : vector<8x128xf32>, i32 -> vector<8x128xf32>
    %c127_i32_121 = arith.constant 127 : i32
    %610 = tpu.dynamic_rotate %608 by %c127_i32_121 dim 1 : vector<8x128xf32>, i32 -> vector<8x128xf32>
    %611 = vector.broadcast %69 : f32 to vector<8x128xf32>
    %612 = arith.mulf %611, %609 : vector<8x128xf32>
    %613 = arith.addf %592, %612 : vector<8x128xf32>
    %614 = vector.broadcast %96 : f32 to vector<8x128xf32>
    %615 = arith.mulf %614, %609 : vector<8x128xf32>
    %616 = arith.addf %595, %615 : vector<8x128xf32>
    %617 = vector.broadcast %123 : f32 to vector<8x128xf32>
    %618 = arith.mulf %617, %609 : vector<8x128xf32>
    %619 = arith.addf %598, %618 : vector<8x128xf32>
    %620 = vector.broadcast %150 : f32 to vector<8x128xf32>
    %621 = arith.mulf %620, %609 : vector<8x128xf32>
    %622 = arith.addf %601, %621 : vector<8x128xf32>
    %623 = vector.broadcast %177 : f32 to vector<8x128xf32>
    %624 = arith.mulf %623, %609 : vector<8x128xf32>
    %625 = arith.addf %604, %624 : vector<8x128xf32>
    %626 = vector.broadcast %70 : f32 to vector<8x128xf32>
    %627 = arith.mulf %626, %608 : vector<8x128xf32>
    %628 = arith.addf %613, %627 : vector<8x128xf32>
    %629 = vector.broadcast %97 : f32 to vector<8x128xf32>
    %630 = arith.mulf %629, %608 : vector<8x128xf32>
    %631 = arith.addf %616, %630 : vector<8x128xf32>
    %632 = vector.broadcast %124 : f32 to vector<8x128xf32>
    %633 = arith.mulf %632, %608 : vector<8x128xf32>
    %634 = arith.addf %619, %633 : vector<8x128xf32>
    %635 = vector.broadcast %151 : f32 to vector<8x128xf32>
    %636 = arith.mulf %635, %608 : vector<8x128xf32>
    %637 = arith.addf %622, %636 : vector<8x128xf32>
    %638 = vector.broadcast %178 : f32 to vector<8x128xf32>
    %639 = arith.mulf %638, %608 : vector<8x128xf32>
    %640 = arith.addf %625, %639 : vector<8x128xf32>
    %641 = vector.broadcast %71 : f32 to vector<8x128xf32>
    %642 = arith.mulf %641, %610 : vector<8x128xf32>
    %643 = arith.addf %628, %642 : vector<8x128xf32>
    %644 = vector.broadcast %98 : f32 to vector<8x128xf32>
    %645 = arith.mulf %644, %610 : vector<8x128xf32>
    %646 = arith.addf %631, %645 : vector<8x128xf32>
    %647 = vector.broadcast %125 : f32 to vector<8x128xf32>
    %648 = arith.mulf %647, %610 : vector<8x128xf32>
    %649 = arith.addf %634, %648 : vector<8x128xf32>
    %650 = vector.broadcast %152 : f32 to vector<8x128xf32>
    %651 = arith.mulf %650, %610 : vector<8x128xf32>
    %652 = arith.addf %637, %651 : vector<8x128xf32>
    %653 = vector.broadcast %179 : f32 to vector<8x128xf32>
    %654 = arith.mulf %653, %610 : vector<8x128xf32>
    %655 = arith.addf %640, %654 : vector<8x128xf32>
    %656 = vector.broadcast %180 : f32 to vector<8x128xf32>
    %657 = arith.addf %643, %656 : vector<8x128xf32>
    %658 = arith.negf %657 : vector<8x128xf32>
    %659 = math.exp %658 : vector<8x128xf32>
    %cst = arith.constant 1.000000e+00 : f32
    %660 = vector.broadcast %cst : f32 to vector<8x128xf32>
    %661 = arith.addf %660, %659 : vector<8x128xf32>
    %662 = arith.divf %660, %661 : vector<8x128xf32>
    %663 = vector.broadcast %181 : f32 to vector<8x128xf32>
    %664 = arith.addf %646, %663 : vector<8x128xf32>
    %665 = arith.negf %664 : vector<8x128xf32>
    %666 = math.exp %665 : vector<8x128xf32>
    %cst_122 = arith.constant 1.000000e+00 : f32
    %667 = vector.broadcast %cst_122 : f32 to vector<8x128xf32>
    %668 = arith.addf %667, %666 : vector<8x128xf32>
    %669 = arith.divf %667, %668 : vector<8x128xf32>
    %670 = vector.broadcast %182 : f32 to vector<8x128xf32>
    %671 = arith.addf %649, %670 : vector<8x128xf32>
    %672 = arith.negf %671 : vector<8x128xf32>
    %673 = math.exp %672 : vector<8x128xf32>
    %cst_123 = arith.constant 1.000000e+00 : f32
    %674 = vector.broadcast %cst_123 : f32 to vector<8x128xf32>
    %675 = arith.addf %674, %673 : vector<8x128xf32>
    %676 = arith.divf %674, %675 : vector<8x128xf32>
    %677 = vector.broadcast %183 : f32 to vector<8x128xf32>
    %678 = arith.addf %652, %677 : vector<8x128xf32>
    %679 = arith.negf %678 : vector<8x128xf32>
    %680 = math.exp %679 : vector<8x128xf32>
    %cst_124 = arith.constant 1.000000e+00 : f32
    %681 = vector.broadcast %cst_124 : f32 to vector<8x128xf32>
    %682 = arith.addf %681, %680 : vector<8x128xf32>
    %683 = arith.divf %681, %682 : vector<8x128xf32>
    %684 = vector.broadcast %184 : f32 to vector<8x128xf32>
    %685 = arith.addf %655, %684 : vector<8x128xf32>
    %686 = arith.negf %685 : vector<8x128xf32>
    %687 = math.exp %686 : vector<8x128xf32>
    %cst_125 = arith.constant 1.000000e+00 : f32
    %688 = vector.broadcast %cst_125 : f32 to vector<8x128xf32>
    %689 = arith.addf %688, %687 : vector<8x128xf32>
    %690 = arith.divf %688, %689 : vector<8x128xf32>
    %691 = vector.broadcast %185 : f32 to vector<8x128xf32>
    %692 = arith.mulf %691, %662 : vector<8x128xf32>
    %693 = vector.broadcast %186 : f32 to vector<8x128xf32>
    %694 = arith.mulf %693, %669 : vector<8x128xf32>
    %695 = arith.addf %692, %694 : vector<8x128xf32>
    %696 = vector.broadcast %187 : f32 to vector<8x128xf32>
    %697 = arith.mulf %696, %676 : vector<8x128xf32>
    %698 = arith.addf %695, %697 : vector<8x128xf32>
    %699 = vector.broadcast %188 : f32 to vector<8x128xf32>
    %700 = arith.mulf %699, %683 : vector<8x128xf32>
    %701 = arith.addf %698, %700 : vector<8x128xf32>
    %702 = vector.broadcast %189 : f32 to vector<8x128xf32>
    %703 = arith.mulf %702, %690 : vector<8x128xf32>
    %704 = arith.addf %701, %703 : vector<8x128xf32>
    %705 = vector.broadcast %200 : f32 to vector<8x128xf32>
    %706 = arith.addf %704, %705 : vector<8x128xf32>
    %707 = arith.negf %706 : vector<8x128xf32>
    %708 = math.exp %707 : vector<8x128xf32>
    %cst_126 = arith.constant 1.000000e+00 : f32
    %709 = vector.broadcast %cst_126 : f32 to vector<8x128xf32>
    %710 = arith.addf %709, %708 : vector<8x128xf32>
    %711 = arith.divf %709, %710 : vector<8x128xf32>
    %c0_127 = arith.constant 0 : index
    %712 = arith.index_cast %204 : i32 to index
    %c0_128 = arith.constant 0 : index
    %713 = vector.load %arg1[%c0_127, %712, %c0_128] : memref<3x8x128xf32, #tpu.memory_space<vmem>>, vector<1x8x128xf32>
    %714 = vector.shape_cast %713 : vector<1x8x128xf32> to vector<8x128xf32>
    %c0_129 = arith.constant 0 : index
    %715 = arith.index_cast %204 : i32 to index
    %c0_130 = arith.constant 0 : index
    %716 = vector.load %arg3[%c0_129, %715, %c0_130] : memref<3x8x128xf32, #tpu.memory_space<vmem>>, vector<1x8x128xf32>
    %717 = vector.shape_cast %716 : vector<1x8x128xf32> to vector<8x128xf32>
    %c0_131 = arith.constant 0 : index
    %718 = arith.index_cast %204 : i32 to index
    %c0_132 = arith.constant 0 : index
    %719 = vector.load %arg8[%c0_131, %718, %c0_132] : memref<9x8x128xf32, #tpu.memory_space<vmem>>, vector<1x8x128xf32>
    %720 = vector.shape_cast %719 : vector<1x8x128xf32> to vector<8x128xf32>
    %721 = vector.shape_cast %711 : vector<8x128xf32> to vector<1x8x128xf32>
    tpu.vector_store %arg8[%c0_131, %718, %c0_132], %721 {strides = array<i32>} : memref<9x8x128xf32, #tpu.memory_space<vmem>>, vector<1x8x128xf32>,
    %722 = arith.mulf %711, %714 : vector<8x128xf32>
    %c3_133 = arith.constant 3 : index
    %723 = arith.index_cast %204 : i32 to index
    %c0_134 = arith.constant 0 : index
    %724 = vector.load %arg8[%c3_133, %723, %c0_134] : memref<9x8x128xf32, #tpu.memory_space<vmem>>, vector<1x8x128xf32>
    %725 = vector.shape_cast %724 : vector<1x8x128xf32> to vector<8x128xf32>
    %726 = vector.shape_cast %722 : vector<8x128xf32> to vector<1x8x128xf32>
    tpu.vector_store %arg8[%c3_133, %723, %c0_134], %726 {strides = array<i32>} : memref<9x8x128xf32, #tpu.memory_space<vmem>>, vector<1x8x128xf32>,
    %727 = arith.mulf %711, %717 : vector<8x128xf32>
    %c6_135 = arith.constant 6 : index
    %728 = arith.index_cast %204 : i32 to index
    %c0_136 = arith.constant 0 : index
    %729 = vector.load %arg8[%c6_135, %728, %c0_136] : memref<9x8x128xf32, #tpu.memory_space<vmem>>, vector<1x8x128xf32>
    %730 = vector.shape_cast %729 : vector<1x8x128xf32> to vector<8x128xf32>
    %731 = vector.shape_cast %727 : vector<8x128xf32> to vector<1x8x128xf32>
    tpu.vector_store %arg8[%c6_135, %728, %c0_136], %731 {strides = array<i32>} : memref<9x8x128xf32, #tpu.memory_space<vmem>>, vector<1x8x128xf32>,
    %732 = vector.broadcast %190 : f32 to vector<8x128xf32>
    %733 = arith.mulf %732, %662 : vector<8x128xf32>
    %734 = vector.broadcast %191 : f32 to vector<8x128xf32>
    %735 = arith.mulf %734, %669 : vector<8x128xf32>
    %736 = arith.addf %733, %735 : vector<8x128xf32>
    %737 = vector.broadcast %192 : f32 to vector<8x128xf32>
    %738 = arith.mulf %737, %676 : vector<8x128xf32>
    %739 = arith.addf %736, %738 : vector<8x128xf32>
    %740 = vector.broadcast %193 : f32 to vector<8x128xf32>
    %741 = arith.mulf %740, %683 : vector<8x128xf32>
    %742 = arith.addf %739, %741 : vector<8x128xf32>
    %743 = vector.broadcast %194 : f32 to vector<8x128xf32>
    %744 = arith.mulf %743, %690 : vector<8x128xf32>
    %745 = arith.addf %742, %744 : vector<8x128xf32>
    %746 = vector.broadcast %201 : f32 to vector<8x128xf32>
    %747 = arith.addf %745, %746 : vector<8x128xf32>
    %748 = arith.negf %747 : vector<8x128xf32>
    %749 = math.exp %748 : vector<8x128xf32>
    %cst_137 = arith.constant 1.000000e+00 : f32
    %750 = vector.broadcast %cst_137 : f32 to vector<8x128xf32>
    %751 = arith.addf %750, %749 : vector<8x128xf32>
    %752 = arith.divf %750, %751 : vector<8x128xf32>
    %c1_138 = arith.constant 1 : index
    %753 = arith.index_cast %204 : i32 to index
    %c0_139 = arith.constant 0 : index
    %754 = vector.load %arg1[%c1_138, %753, %c0_139] : memref<3x8x128xf32, #tpu.memory_space<vmem>>, vector<1x8x128xf32>
    %755 = vector.shape_cast %754 : vector<1x8x128xf32> to vector<8x128xf32>
    %c1_140 = arith.constant 1 : index
    %756 = arith.index_cast %204 : i32 to index
    %c0_141 = arith.constant 0 : index
    %757 = vector.load %arg3[%c1_140, %756, %c0_141] : memref<3x8x128xf32, #tpu.memory_space<vmem>>, vector<1x8x128xf32>
    %758 = vector.shape_cast %757 : vector<1x8x128xf32> to vector<8x128xf32>
    %c1_142 = arith.constant 1 : index
    %759 = arith.index_cast %204 : i32 to index
    %c0_143 = arith.constant 0 : index
    %760 = vector.load %arg8[%c1_142, %759, %c0_143] : memref<9x8x128xf32, #tpu.memory_space<vmem>>, vector<1x8x128xf32>
    %761 = vector.shape_cast %760 : vector<1x8x128xf32> to vector<8x128xf32>
    %762 = vector.shape_cast %752 : vector<8x128xf32> to vector<1x8x128xf32>
    tpu.vector_store %arg8[%c1_142, %759, %c0_143], %762 {strides = array<i32>} : memref<9x8x128xf32, #tpu.memory_space<vmem>>, vector<1x8x128xf32>,
    %763 = arith.mulf %752, %755 : vector<8x128xf32>
    %c4_144 = arith.constant 4 : index
    %764 = arith.index_cast %204 : i32 to index
    %c0_145 = arith.constant 0 : index
    %765 = vector.load %arg8[%c4_144, %764, %c0_145] : memref<9x8x128xf32, #tpu.memory_space<vmem>>, vector<1x8x128xf32>
    %766 = vector.shape_cast %765 : vector<1x8x128xf32> to vector<8x128xf32>
    %767 = vector.shape_cast %763 : vector<8x128xf32> to vector<1x8x128xf32>
    tpu.vector_store %arg8[%c4_144, %764, %c0_145], %767 {strides = array<i32>} : memref<9x8x128xf32, #tpu.memory_space<vmem>>, vector<1x8x128xf32>,
    %768 = arith.mulf %752, %758 : vector<8x128xf32>
    %c7_146 = arith.constant 7 : index
    %769 = arith.index_cast %204 : i32 to index
    %c0_147 = arith.constant 0 : index
    %770 = vector.load %arg8[%c7_146, %769, %c0_147] : memref<9x8x128xf32, #tpu.memory_space<vmem>>, vector<1x8x128xf32>
    %771 = vector.shape_cast %770 : vector<1x8x128xf32> to vector<8x128xf32>
    %772 = vector.shape_cast %768 : vector<8x128xf32> to vector<1x8x128xf32>
    tpu.vector_store %arg8[%c7_146, %769, %c0_147], %772 {strides = array<i32>} : memref<9x8x128xf32, #tpu.memory_space<vmem>>, vector<1x8x128xf32>,
    %773 = vector.broadcast %195 : f32 to vector<8x128xf32>
    %774 = arith.mulf %773, %662 : vector<8x128xf32>
    %775 = vector.broadcast %196 : f32 to vector<8x128xf32>
    %776 = arith.mulf %775, %669 : vector<8x128xf32>
    %777 = arith.addf %774, %776 : vector<8x128xf32>
    %778 = vector.broadcast %197 : f32 to vector<8x128xf32>
    %779 = arith.mulf %778, %676 : vector<8x128xf32>
    %780 = arith.addf %777, %779 : vector<8x128xf32>
    %781 = vector.broadcast %198 : f32 to vector<8x128xf32>
    %782 = arith.mulf %781, %683 : vector<8x128xf32>
    %783 = arith.addf %780, %782 : vector<8x128xf32>
    %784 = vector.broadcast %199 : f32 to vector<8x128xf32>
    %785 = arith.mulf %784, %690 : vector<8x128xf32>
    %786 = arith.addf %783, %785 : vector<8x128xf32>
    %787 = vector.broadcast %202 : f32 to vector<8x128xf32>
    %788 = arith.addf %786, %787 : vector<8x128xf32>
    %789 = arith.negf %788 : vector<8x128xf32>
    %790 = math.exp %789 : vector<8x128xf32>
    %cst_148 = arith.constant 1.000000e+00 : f32
    %791 = vector.broadcast %cst_148 : f32 to vector<8x128xf32>
    %792 = arith.addf %791, %790 : vector<8x128xf32>
    %793 = arith.divf %791, %792 : vector<8x128xf32>
    %c2_149 = arith.constant 2 : index
    %794 = arith.index_cast %204 : i32 to index
    %c0_150 = arith.constant 0 : index
    %795 = vector.load %arg1[%c2_149, %794, %c0_150] : memref<3x8x128xf32, #tpu.memory_space<vmem>>, vector<1x8x128xf32>
    %796 = vector.shape_cast %795 : vector<1x8x128xf32> to vector<8x128xf32>
    %c2_151 = arith.constant 2 : index
    %797 = arith.index_cast %204 : i32 to index
    %c0_152 = arith.constant 0 : index
    %798 = vector.load %arg3[%c2_151, %797, %c0_152] : memref<3x8x128xf32, #tpu.memory_space<vmem>>, vector<1x8x128xf32>
    %799 = vector.shape_cast %798 : vector<1x8x128xf32> to vector<8x128xf32>
    %c2_153 = arith.constant 2 : index
    %800 = arith.index_cast %204 : i32 to index
    %c0_154 = arith.constant 0 : index
    %801 = vector.load %arg8[%c2_153, %800, %c0_154] : memref<9x8x128xf32, #tpu.memory_space<vmem>>, vector<1x8x128xf32>
    %802 = vector.shape_cast %801 : vector<1x8x128xf32> to vector<8x128xf32>
    %803 = vector.shape_cast %793 : vector<8x128xf32> to vector<1x8x128xf32>
    tpu.vector_store %arg8[%c2_153, %800, %c0_154], %803 {strides = array<i32>} : memref<9x8x128xf32, #tpu.memory_space<vmem>>, vector<1x8x128xf32>,
    %804 = arith.mulf %793, %796 : vector<8x128xf32>
    %c5_155 = arith.constant 5 : index
    %805 = arith.index_cast %204 : i32 to index
    %c0_156 = arith.constant 0 : index
    %806 = vector.load %arg8[%c5_155, %805, %c0_156] : memref<9x8x128xf32, #tpu.memory_space<vmem>>, vector<1x8x128xf32>
    %807 = vector.shape_cast %806 : vector<1x8x128xf32> to vector<8x128xf32>
    %808 = vector.shape_cast %804 : vector<8x128xf32> to vector<1x8x128xf32>
    tpu.vector_store %arg8[%c5_155, %805, %c0_156], %808 {strides = array<i32>} : memref<9x8x128xf32, #tpu.memory_space<vmem>>, vector<1x8x128xf32>,
    %809 = arith.mulf %793, %799 : vector<8x128xf32>
    %c8_157 = arith.constant 8 : index
    %810 = arith.index_cast %204 : i32 to index
    %c0_158 = arith.constant 0 : index
    %811 = vector.load %arg8[%c8_157, %810, %c0_158] : memref<9x8x128xf32, #tpu.memory_space<vmem>>, vector<1x8x128xf32>
    %812 = vector.shape_cast %811 : vector<1x8x128xf32> to vector<8x128xf32>
    %813 = vector.shape_cast %809 : vector<8x128xf32> to vector<1x8x128xf32>
    tpu.vector_store %arg8[%c8_157, %810, %c0_158], %813 {strides = array<i32>} : memref<9x8x128xf32, #tpu.memory_space<vmem>>, vector<1x8x128xf32>,
    %c1_i32_159 = arith.constant 1 : i32
    return
  }
  func.func @transform_0(%arg0: i32) -> (i32, i32, i32) {
    %c0_i32 = arith.constant 0 : i32
    %c0_i32_0 = arith.constant 0 : i32
    %c0_i32_1 = arith.constant 0 : i32
    return %c0_i32, %arg0, %c0_i32_0 : i32, i32, i32
  }
  func.func @transform_1(%arg0: i32) -> (i32, i32, i32, i32) {
    %c0_i32 = arith.constant 0 : i32
    %c0_i32_0 = arith.constant 0 : i32
    %c0_i32_1 = arith.constant 0 : i32
    %c0_i32_2 = arith.constant 0 : i32
    return %arg0, %c0_i32, %c0_i32_0, %c0_i32_1 : i32, i32, i32, i32
  }
  func.func @transform_2(%arg0: i32) -> (i32, i32, i32) {
    %c0_i32 = arith.constant 0 : i32
    %c0_i32_0 = arith.constant 0 : i32
    %c0_i32_1 = arith.constant 0 : i32
    return %c0_i32, %arg0, %c0_i32_0 : i32, i32, i32
  }
  func.func @transform_3(%arg0: i32) -> i32 {
    %c0_i32 = arith.constant 0 : i32
    %c0_i32_0 = arith.constant 0 : i32
    return %c0_i32 : i32
  }
  func.func @transform_4(%arg0: i32) -> i32 {
    %c0_i32 = arith.constant 0 : i32
    %c0_i32_0 = arith.constant 0 : i32
    return %c0_i32 : i32
  }
  func.func @transform_5(%arg0: i32) -> i32 {
    %c0_i32 = arith.constant 0 : i32
    %c0_i32_0 = arith.constant 0 : i32
    return %c0_i32 : i32
  }
  func.func @transform_6(%arg0: i32) -> i32 {
    %c0_i32 = arith.constant 0 : i32
    %c0_i32_0 = arith.constant 0 : i32
    return %c0_i32 : i32
  }
  func.func @transform_7(%arg0: i32) -> (i32, i32, i32) {
    %c0_i32 = arith.constant 0 : i32
    %c0_i32_0 = arith.constant 0 : i32
    %c0_i32_1 = arith.constant 0 : i32
    return %c0_i32, %arg0, %c0_i32_0 : i32, i32, i32
  }
}

</mosaic_0001>

<llo_original>
// kernel: tpu_custom_call.1
$region0: #{tpu_custom_call.1}
  #allocation0 [shape = 'u32[]', space=smem, size = 0x4, offset = 0x4, fixed_abs, tag = 'smem constant byte address 0x4 - core index']
  #allocation1 [shape = 'u32[144,128]{1,0:T(1,128)}', space=vmem, size = 0x12000, scoped, tag = 'internal scratch']
  #allocation2 [shape = 'f32[3,10,128]{2,1,0:T(8,128)}', space=vmem, size = 0x6000, scoped, tag = 'scratch operand']
  %s0 = inlined_call_operand.hbm [shape: f32[3,16,128], index: 0, kind: input, shape index: {}]
  %s1 = inlined_call_operand.hbm [shape: f32[2,3,2,128], index: 1, kind: input, shape index: {}]
  %s2 = inlined_call_operand.hbm [shape: f32[3,16,128], index: 2, kind: input, shape index: {}]
  %s3 = inlined_call_operand.vmem [shape: f32[135], index: 3, kind: input, shape index: {}]
  %s4 = inlined_call_operand.vmem [shape: f32[5], index: 4, kind: input, shape index: {}]
  %s5 = inlined_call_operand.vmem [shape: f32[15], index: 5, kind: input, shape index: {}]
  %s6 = inlined_call_operand.vmem [shape: f32[3], index: 6, kind: input, shape index: {}]
  %s7 = inlined_call_operand.hbm [shape: f32[9,16,128], index: 7, kind: output, shape index: {}]
  %s8 = sld [smem:[#allocation0]]
  $region89: #{tpu_custom_call.1} parent=0
    _
  %s10 = ssub.s32 1, %s8
  %s11 = scalar_select 0, %s10, %s8
  $region1: #{tpu_custom_call.1} parent=0
    #allocation3 [shape = 'u8[24576]{0}', space=vmem, size = 0x6000, scoped, tag = 'input window, operand 0']
    #allocation4 [shape = 's32[2]{0}', space=sflag, size = 0x8, scoped, tag = 'scoped memory for tpu_custom_call.1']
    #allocation5 [shape = 's32[2]{0}', space=sflag, size = 0x8, scoped, tag = 'scoped memory for tpu_custom_call.1']
    #allocation6 [shape = 's32[2]{0}', space=sflag, size = 0x8, scoped, tag = 'scoped memory for tpu_custom_call.1']
    #allocation7 [shape = 'u8[6144]{0}', space=vmem, size = 0x1800, scoped, tag = 'input window, operand 1']
    #allocation8 [shape = 's32[2]{0}', space=sflag, size = 0x8, scoped, tag = 'scoped memory for tpu_custom_call.1']
    #allocation9 [shape = 'u8[24576]{0}', space=vmem, size = 0x6000, scoped, tag = 'input window, operand 2']
    #allocation10 [shape = 'u8[1024]{0}', space=smem, size = 0x400, scoped, tag = 'input window, operand 3, single buffered']
    #allocation11 [shape = 'u8[512]{0}', space=smem, size = 0x200, scoped, tag = 'input window, operand 4, single buffered']
    #allocation12 [shape = 's32[1]{0}', space=sflag, size = 0x4, scoped, tag = 'scoped memory for tpu_custom_call.1']
    #allocation13 [shape = 'u8[512]{0}', space=smem, size = 0x200, scoped, tag = 'input window, operand 5, single buffered']
    #allocation14 [shape = 'u8[512]{0}', space=smem, size = 0x200, scoped, tag = 'input window, operand 6, single buffered']
    #allocation15 [shape = 's32[1]{0}', space=sflag, size = 0x4, scoped, tag = 'scoped memory for tpu_custom_call.1']
    #allocation16 [shape = 'u8[73728]{0}', space=vmem, size = 0x12000, scoped, tag = 'output window, operand 0']
    %12 = vsyncpa [#allocation4], 0
    %s13 = scalar_lea.sflag [#allocation4], 1
    %14 = vsyncpa %s13, 0
    %15 = vsyncpa [#allocation8], 0
    %s16 = scalar_lea.sflag [#allocation8], 1
    %17 = vsyncpa %s16, 0
    %18 = vsyncpa [#allocation6], 0
    %19 = vsyncpa [#allocation12], 0
    %20 = vsyncpa [#allocation15], 0
    %21 = vsyncpa [#allocation5], 0
    %s22 = scalar_lea.sflag [#allocation5], 1
    %23 = vsyncpa %s22, 0
    loop: start=0, step=1, limit=4
    $region2: #{tpu_custom_call.1} parent=1 // loop_pre_header
      _
    $region3: #{tpu_custom_call.1} parent=1 // loop_header
      %s25 = sphi 0, %s29
      %p26 = scmp.ge.s32.totalorder %s25, 4
      %s35 = sphi 0, %s37
      %s38 = sphi 0, %s35
      %s39 = sphi 0, %s38
      %s55 = sphi 0, %s39
      %s61 = sphi 0, %s63
      %s64 = sphi 0, %s61
      %s65 = sphi 0, %s64
      %s81 = sphi 0, %s65
      %s87 = sphi 0, %s89
      %s90 = sphi 0, %s87
      %s91 = sphi 0, %s90
      %s107 = sphi 0, %s91
      %s111 = sphi 0, %s111
      %s113 = sphi 0, %s111
      %s114 = sphi 0, %s113
      %s128 = sphi 0, %s114
      %s132 = sphi 0, %s132
      %s134 = sphi 0, %s132
      %s135 = sphi 0, %s134
      %s149 = sphi 0, %s135
      %s153 = sphi 0, %s153
      %s155 = sphi 0, %s153
      %s156 = sphi 0, %s155
      %s170 = sphi 0, %s156
      %s174 = sphi 0, %s174
      %s176 = sphi 0, %s174
      %s177 = sphi 0, %s176
      %s191 = sphi 0, %s177
      %s197 = sphi 0, %s199
      %s200 = sphi 0, %s197
      %s201 = sphi 0, %s200
      %s217 = sphi 0, %s201
    $region4: #{tpu_custom_call.1} parent=1 // loop_header_branch
      %28 = sbr.rel (%p26) target = $region8
    $region5: #{tpu_custom_call.1} parent=1 // loop_body
      %s30 = ssub.s32 %s25, 1
      %s31 = ssub.s32 %s25, 2
      %s32 = sadd.s32 %s25, 1
      %s33 = ssub.s32 %s25, %s32
      %p34 = scmp.eq.s32.totalorder %s33, 0
      %s36 = sadd.s32 %s35, 1
      %s37 = scalar_select %p34, %s35, %s36
      %p40 = pneg %p34
      %p41 = scmp.eq.s32.totalorder %s25, 1
      %p42 = por %p40, %p41
      %p43 = scmp.ne.s32.totalorder %s35, %s38
      %p44 = scmp.eq.s32.totalorder %s25, 0
      %p45 = por %p43, %p44
      %p46 = scmp.ne.s32.totalorder %s35, %s38
      %p47 = scmp.eq.s32.totalorder %s30, 1
      %p48 = por %p46, %p47
      %p49 = scmp.ne.s32.totalorder %s38, %s39
      %p50 = scmp.eq.s32.totalorder %s30, 0
      %p51 = por %p49, %p50
      %p52 = scmp.ne.s32.totalorder %s38, %s39
      %p53 = scmp.eq.s32.totalorder %s31, 1
      %p54 = por %p52, %p53
      %p56 = scmp.ne.s32.totalorder %s39, %s55
      %p57 = scmp.eq.s32.totalorder %s31, 0
      %p58 = por %p56, %p57
      %s59 = ssub.s32 %s25, %s32
      %p60 = scmp.eq.s32.totalorder %s59, 0
      %s62 = sadd.s32 %s61, 1
      %s63 = scalar_select %p60, %s61, %s62
      %p66 = pneg %p60
      %p67 = scmp.eq.s32.totalorder %s25, 1
      %p68 = por %p66, %p67
      %p69 = scmp.ne.s32.totalorder %s61, %s64
      %p70 = scmp.eq.s32.totalorder %s25, 0
      %p71 = por %p69, %p70
      %p72 = scmp.ne.s32.totalorder %s61, %s64
      %p73 = scmp.eq.s32.totalorder %s30, 1
      %p74 = por %p72, %p73
      %p75 = scmp.ne.s32.totalorder %s64, %s65
      %p76 = scmp.eq.s32.totalorder %s30, 0
      %p77 = por %p75, %p76
      %p78 = scmp.ne.s32.totalorder %s64, %s65
      %p79 = scmp.eq.s32.totalorder %s31, 1
      %p80 = por %p78, %p79
      %p82 = scmp.ne.s32.totalorder %s65, %s81
      %p83 = scmp.eq.s32.totalorder %s31, 0
      %p84 = por %p82, %p83
      %s85 = ssub.s32 %s25, %s32
      %p86 = scmp.eq.s32.totalorder %s85, 0
      %s88 = sadd.s32 %s87, 1
      %s89 = scalar_select %p86, %s87, %s88
      %p92 = pneg %p86
      %p93 = scmp.eq.s32.totalorder %s25, 1
      %p94 = por %p92, %p93
      %p95 = scmp.ne.s32.totalorder %s87, %s90
      %p96 = scmp.eq.s32.totalorder %s25, 0
      %p97 = por %p95, %p96
      %p98 = scmp.ne.s32.totalorder %s87, %s90
      %p99 = scmp.eq.s32.totalorder %s30, 1
      %p100 = por %p98, %p99
      %p101 = scmp.ne.s32.totalorder %s90, %s91
      %p102 = scmp.eq.s32.totalorder %s30, 0
      %p103 = por %p101, %p102
      %p104 = scmp.ne.s32.totalorder %s90, %s91
      %p105 = scmp.eq.s32.totalorder %s31, 1
      %p106 = por %p104, %p105
      %p108 = scmp.ne.s32.totalorder %s91, %s107
      %p109 = scmp.eq.s32.totalorder %s31, 0
      %p110 = por %p108, %p109
      %s112 = sadd.s32 %s111, 1
      %p115 = scmp.eq.s32.totalorder %s25, 1
      %p116 = scmp.ne.s32.totalorder %s111, %s113
      %p117 = scmp.eq.s32.totalorder %s25, 0
      %p118 = por %p116, %p117
      %p119 = scmp.ne.s32.totalorder %s111, %s113
      %p120 = scmp.eq.s32.totalorder %s30, 1
      %p121 = por %p119, %p120
      %p122 = scmp.ne.s32.totalorder %s113, %s114
      %p123 = scmp.eq.s32.totalorder %s30, 0
      %p124 = por %p122, %p123
      %p125 = scmp.ne.s32.totalorder %s113, %s114
      %p126 = scmp.eq.s32.totalorder %s31, 1
      %p127 = por %p125, %p126
      %p129 = scmp.ne.s32.totalorder %s114, %s128
      %p130 = scmp.eq.s32.totalorder %s31, 0
      %p131 = por %p129, %p130
      %s133 = sadd.s32 %s132, 1
      %p136 = scmp.eq.s32.totalorder %s25, 1
      %p137 = scmp.ne.s32.totalorder %s132, %s134
      %p138 = scmp.eq.s32.totalorder %s25, 0
      %p139 = por %p137, %p138
      %p140 = scmp.ne.s32.totalorder %s132, %s134
      %p141 = scmp.eq.s32.totalorder %s30, 1
      %p142 = por %p140, %p141
      %p143 = scmp.ne.s32.totalorder %s134, %s135
      %p144 = scmp.eq.s32.totalorder %s30, 0
      %p145 = por %p143, %p144
      %p146 = scmp.ne.s32.totalorder %s134, %s135
      %p147 = scmp.eq.s32.totalorder %s31, 1
      %p148 = por %p146, %p147
      %p150 = scmp.ne.s32.totalorder %s135, %s149
      %p151 = scmp.eq.s32.totalorder %s31, 0
      %p152 = por %p150, %p151
      %s154 = sadd.s32 %s153, 1
      %p157 = scmp.eq.s32.totalorder %s25, 1
      %p158 = scmp.ne.s32.totalorder %s153, %s155
      %p159 = scmp.eq.s32.totalorder %s25, 0
      %p160 = por %p158, %p159
      %p161 = scmp.ne.s32.totalorder %s153, %s155
      %p162 = scmp.eq.s32.totalorder %s30, 1
      %p163 = por %p161, %p162
      %p164 = scmp.ne.s32.totalorder %s155, %s156
      %p165 = scmp.eq.s32.totalorder %s30, 0
      %p166 = por %p164, %p165
      %p167 = scmp.ne.s32.totalorder %s155, %s156
      %p168 = scmp.eq.s32.totalorder %s31, 1
      %p169 = por %p167, %p168
      %p171 = scmp.ne.s32.totalorder %s156, %s170
      %p172 = scmp.eq.s32.totalorder %s31, 0
      %p173 = por %p171, %p172
      %s175 = sadd.s32 %s174, 1
      %p178 = scmp.eq.s32.totalorder %s25, 1
      %p179 = scmp.ne.s32.totalorder %s174, %s176
      %p180 = scmp.eq.s32.totalorder %s25, 0
      %p181 = por %p179, %p180
      %p182 = scmp.ne.s32.totalorder %s174, %s176
      %p183 = scmp.eq.s32.totalorder %s30, 1
      %p184 = por %p182, %p183
      %p185 = scmp.ne.s32.totalorder %s176, %s177
      %p186 = scmp.eq.s32.totalorder %s30, 0
      %p187 = por %p185, %p186
      %p188 = scmp.ne.s32.totalorder %s176, %s177
      %p189 = scmp.eq.s32.totalorder %s31, 1
      %p190 = por %p188, %p189
      %p192 = scmp.ne.s32.totalorder %s177, %s191
      %p193 = scmp.eq.s32.totalorder %s31, 0
      %p194 = por %p192, %p193
      %s195 = ssub.s32 %s25, %s32
      %p196 = scmp.eq.s32.totalorder %s195, 0
      %s198 = sadd.s32 %s197, 1
      %s199 = scalar_select %p196, %s197, %s198
      %p202 = pneg %p196
      %p203 = scmp.eq.s32.totalorder %s25, 1
      %p204 = por %p202, %p203
      %p205 = scmp.ne.s32.totalorder %s197, %s200
      %p206 = scmp.eq.s32.totalorder %s25, 0
      %p207 = por %p205, %p206
      %p208 = scmp.ne.s32.totalorder %s197, %s200
      %p209 = scmp.eq.s32.totalorder %s30, 1
      %p210 = por %p208, %p209
      %p211 = scmp.ne.s32.totalorder %s200, %s201
      %p212 = scmp.eq.s32.totalorder %s30, 0
      %p213 = por %p211, %p212
      %p214 = scmp.ne.s32.totalorder %s200, %s201
      %p215 = scmp.eq.s32.totalorder %s31, 1
      %p216 = por %p214, %p215
      %p218 = scmp.ne.s32.totalorder %s201, %s217
      %p219 = scmp.eq.s32.totalorder %s31, 0
      %p220 = por %p218, %p219
      %p221 = scmp.le.s32.totalorder 1, %s25
      %p222 = scmp.lt.s32.totalorder %s25, 3
      %p223 = pnand %p221, %p222
      %p224 = pneg %p223
      // Predicated region
      $region9: #{tpu_custom_call.1} parent=5 // pred_check
        _
      $region10: #{tpu_custom_call.1} parent=5 // pred_check_branch
        %226 = sbr.rel (%p223) target = $region12
      $region11: #{tpu_custom_call.1} parent=5 // pred_region
        %s227 = ssub.s32 %s25, 1
        // Predicated region
        $region13: #{tpu_custom_call.1} parent=11 // pred_check
          %p228 = pneg %p124
        $region14: #{tpu_custom_call.1} parent=11 // pred_check_branch
          %230 = sbr.rel (%p228) target = $region16
        $region15: #{tpu_custom_call.1} parent=11 // pred_region
          %s232 = ssub.s32 32, 32
          %233 = vsyncadd [#allocation6], %s232
          %s235 = sshll.u32 %s3, 4
          %s236 = int_to_ptr.vmem [resolvable:$true] %s235
          %238 = dma.vmem_to_smem %s236, 32, [#allocation10], [#allocation6]
        $region16: #{tpu_custom_call.1} parent=11 // pred_fallthru
          _
        // Predicated region
        $region17: #{tpu_custom_call.1} parent=11 // pred_check
          %p239 = pneg %p145
        $region18: #{tpu_custom_call.1} parent=11 // pred_check_branch
          %241 = sbr.rel (%p239) target = $region20
        $region19: #{tpu_custom_call.1} parent=11 // pred_region
          %s243 = ssub.s32 16, 16
          %244 = vsyncadd [#allocation12], %s243
          %s246 = sshll.u32 %s4, 4
          %s247 = int_to_ptr.vmem [resolvable:$true] %s246
          %249 = dma.vmem_to_smem %s247, 16, [#allocation11], [#allocation12]
        $region20: #{tpu_custom_call.1} parent=11 // pred_fallthru
          _
        // Predicated region
        $region21: #{tpu_custom_call.1} parent=11 // pred_check
          %p250 = pneg %p166
        $region22: #{tpu_custom_call.1} parent=11 // pred_check_branch
          %252 = sbr.rel (%p250) target = $region24
        $region23: #{tpu_custom_call.1} parent=11 // pred_region
          %s254 = ssub.s32 16, 16
          %255 = vsyncadd [#allocation12], %s254
          %s257 = sshll.u32 %s5, 4
          %s258 = int_to_ptr.vmem [resolvable:$true] %s257
          %260 = dma.vmem_to_smem %s258, 16, [#allocation13], [#allocation12]
        $region24: #{tpu_custom_call.1} parent=11 // pred_fallthru
          _
        // Predicated region
        $region25: #{tpu_custom_call.1} parent=11 // pred_check
          %p261 = pneg %p187
        $region26: #{tpu_custom_call.1} parent=11 // pred_check_branch
          %263 = sbr.rel (%p261) target = $region28
        $region27: #{tpu_custom_call.1} parent=11 // pred_region
          %s265 = ssub.s32 16, 16
          %266 = vsyncadd [#allocation15], %s265
          %s268 = sshll.u32 %s6, 4
          %s269 = int_to_ptr.vmem [resolvable:$true] %s268
          %271 = dma.vmem_to_smem %s269, 16, [#allocation14], [#allocation15]
        $region28: #{tpu_custom_call.1} parent=11 // pred_fallthru
          _
      $region12: #{tpu_custom_call.1} parent=5 // pred_fallthru
        _
      %p272 = scmp.lt.s32.totalorder %s25, 2
      // Predicated region
      $region29: #{tpu_custom_call.1} parent=5 // pred_check
        %p273 = pneg %p272
      $region30: #{tpu_custom_call.1} parent=5 // pred_check_branch
        %275 = sbr.rel (%p273) target = $region32
      $region31: #{tpu_custom_call.1} parent=5 // pred_region
        // Predicated region
        $region33: #{tpu_custom_call.1} parent=31 // pred_check
          %p276 = pneg %p45
        $region34: #{tpu_custom_call.1} parent=31 // pred_check_branch
          %278 = sbr.rel (%p276) target = $region36
        $region35: #{tpu_custom_call.1} parent=31 // pred_region
          %s279 = sand.u32 %s35, 1
          %s280 = scalar_lea.sflag [#allocation4], %s279
          %s281 = sand.u32 %s35, 1
          %s282 = smul.addr %s281, 24
          %s283 = scalar_lea.vmem [#allocation3], %s282
          %s285 = ssub.s32 384, 384
          %286 = vsyncadd %s280, %s285
          %s287 = smul.addr %s25, 128
          %s288 = scalar_lea.hbm %s0, %s287
          %s289 = sshll.u32 %s283, 4
          %s290 = int_to_ptr.vmem [resolvable:$true] %s289
          %295 = dma.hbm_to_vmem [thread:$0]  %s288, 384, %s290, %s280, 256, 128, 8
        $region36: #{tpu_custom_call.1} parent=31 // pred_fallthru
          _
        // Predicated region
        $region37: #{tpu_custom_call.1} parent=31 // pred_check
          %p296 = pneg %p71
        $region38: #{tpu_custom_call.1} parent=31 // pred_check_branch
          %298 = sbr.rel (%p296) target = $region40
        $region39: #{tpu_custom_call.1} parent=31 // pred_region
          %s299 = sand.u32 %s25, 1
          %s300 = scalar_lea.sflag [#allocation8], %s299
          %s301 = sand.u32 %s61, 1
          %s302 = smul.addr %s301, 6
          %s303 = scalar_lea.vmem [#allocation7], %s302
          %s305 = ssub.s32 96, 96
          %306 = vsyncadd %s300, %s305
          %s307 = smul.addr %s25, 3
          %s308 = smul.addr %s307, 32
          %s309 = scalar_lea.hbm %s1, %s308
          %s310 = sshll.u32 %s303, 4
          %s311 = int_to_ptr.vmem [resolvable:$true] %s310
          %316 = dma.hbm_to_vmem [thread:$0]  %s309, 96, %s311, %s300, 32, 32, 2
        $region40: #{tpu_custom_call.1} parent=31 // pred_fallthru
          _
        // Predicated region
        $region41: #{tpu_custom_call.1} parent=31 // pred_check
          %p317 = pneg %p97
        $region42: #{tpu_custom_call.1} parent=31 // pred_check_branch
          %319 = sbr.rel (%p317) target = $region44
        $region43: #{tpu_custom_call.1} parent=31 // pred_region
          %s320 = sand.u32 %s25, 1
          %s321 = scalar_lea.sflag [#allocation8], %s320
          %s322 = sand.u32 %s87, 1
          %s323 = smul.addr %s322, 24
          %s324 = scalar_lea.vmem [#allocation9], %s323
          %s326 = ssub.s32 384, 384
          %327 = vsyncadd %s321, %s326
          %s328 = smul.addr %s25, 128
          %s329 = scalar_lea.hbm %s2, %s328
          %s330 = sshll.u32 %s324, 4
          %s331 = int_to_ptr.vmem [resolvable:$true] %s330
          %336 = dma.hbm_to_vmem [thread:$0]  %s329, 384, %s331, %s321, 256, 128, 8
        $region44: #{tpu_custom_call.1} parent=31 // pred_fallthru
          _
      $region32: #{tpu_custom_call.1} parent=5 // pred_fallthru
        _
      %p337 = scmp.le.s32.totalorder 1, %s25
      %p338 = scmp.lt.s32.totalorder %s25, 3
      %p339 = pnand %p337, %p338
      %p340 = pneg %p339
      // Predicated region
      $region45: #{tpu_custom_call.1} parent=5 // pred_check
        _
      $region46: #{tpu_custom_call.1} parent=5 // pred_check_branch
        %342 = sbr.rel (%p339) target = $region48
      $region47: #{tpu_custom_call.1} parent=5 // pred_region
        %s343 = ssub.s32 %s25, 1
        %s344 = sand.u32 %s38, 1
        %s345 = scalar_lea.sflag [#allocation4], %s344
        %s346 = sand.u32 %s38, 1
        %s347 = smul.addr %s346, 24
        %s348 = scalar_lea.vmem [#allocation3], %s347
        // Predicated region
        $region49: #{tpu_custom_call.1} parent=47 // pred_check
          %p349 = pneg %p51
        $region50: #{tpu_custom_call.1} parent=47 // pred_check_branch
          %351 = sbr.rel (%p349) target = $region52
        $region51: #{tpu_custom_call.1} parent=47 // pred_region
          %352 = dma.done %s345, 384
        $region52: #{tpu_custom_call.1} parent=47 // pred_fallthru
          _
        %s353 = sand.u32 %s30, 1
        %s354 = scalar_lea.sflag [#allocation8], %s353
        %s355 = sand.u32 %s64, 1
        %s356 = smul.addr %s355, 6
        %s357 = scalar_lea.vmem [#allocation7], %s356
        // Predicated region
        $region53: #{tpu_custom_call.1} parent=47 // pred_check
          %p358 = pneg %p77
        $region54: #{tpu_custom_call.1} parent=47 // pred_check_branch
          %360 = sbr.rel (%p358) target = $region56
        $region55: #{tpu_custom_call.1} parent=47 // pred_region
          %361 = dma.done %s354, 96
        $region56: #{tpu_custom_call.1} parent=47 // pred_fallthru
          _
        %s362 = sand.u32 %s30, 1
        %s363 = scalar_lea.sflag [#allocation8], %s362
        %s364 = sand.u32 %s90, 1
        %s365 = smul.addr %s364, 24
        %s366 = scalar_lea.vmem [#allocation9], %s365
        // Predicated region
        $region57: #{tpu_custom_call.1} parent=47 // pred_check
          %p367 = pneg %p103
        $region58: #{tpu_custom_call.1} parent=47 // pred_check_branch
          %369 = sbr.rel (%p367) target = $region60
        $region59: #{tpu_custom_call.1} parent=47 // pred_region
          %370 = dma.done %s363, 384
        $region60: #{tpu_custom_call.1} parent=47 // pred_fallthru
          _
        // Predicated region
        $region61: #{tpu_custom_call.1} parent=47 // pred_check
          %p371 = pneg %p124
        $region62: #{tpu_custom_call.1} parent=47 // pred_check_branch
          %373 = sbr.rel (%p371) target = $region64
        $region63: #{tpu_custom_call.1} parent=47 // pred_region
          %374 = dma.done [#allocation6], 32
        $region64: #{tpu_custom_call.1} parent=47 // pred_fallthru
          _
        // Predicated region
        $region65: #{tpu_custom_call.1} parent=47 // pred_check
          %p375 = pneg %p145
        $region66: #{tpu_custom_call.1} parent=47 // pred_check_branch
          %377 = sbr.rel (%p375) target = $region68
        $region67: #{tpu_custom_call.1} parent=47 // pred_region
          %378 = dma.done [#allocation12], 16
        $region68: #{tpu_custom_call.1} parent=47 // pred_fallthru
          _
        // Predicated region
        $region69: #{tpu_custom_call.1} parent=47 // pred_check
          %p379 = pneg %p166
        $region70: #{tpu_custom_call.1} parent=47 // pred_check_branch
          %381 = sbr.rel (%p379) target = $region72
        $region71: #{tpu_custom_call.1} parent=47 // pred_region
          %382 = dma.done [#allocation12], 16
        $region72: #{tpu_custom_call.1} parent=47 // pred_fallthru
          _
        // Predicated region
        $region73: #{tpu_custom_call.1} parent=47 // pred_check
          %p383 = pneg %p187
        $region74: #{tpu_custom_call.1} parent=47 // pred_check_branch
          %385 = sbr.rel (%p383) target = $region76
        $region75: #{tpu_custom_call.1} parent=47 // pred_region
          %386 = dma.done [#allocation15], 16
        $region76: #{tpu_custom_call.1} parent=47 // pred_fallthru
          _
        %387 = sfence
        %s388 = sand.u32 %s38, 1
        %s389 = scalar_lea.sflag [#allocation4], %s388
        %s390 = sand.u32 %s38, 1
        %s391 = smul.addr %s390, 24
        %s392 = scalar_lea.vmem [#allocation3], %s391
        %p393 = pneg %p51
        %p394 = pneg %p48
        %s395 = sand.u32 %s30, 1
        %s396 = scalar_lea.sflag [#allocation8], %s395
        %s397 = sand.u32 %s64, 1
        %s398 = smul.addr %s397, 6
        %s399 = scalar_lea.vmem [#allocation7], %s398
        %p400 = pneg %p77
        %p401 = pneg %p74
        %s402 = sand.u32 %s30, 1
        %s403 = scalar_lea.sflag [#allocation8], %s402
        %s404 = sand.u32 %s90, 1
        %s405 = smul.addr %s404, 24
        %s406 = scalar_lea.vmem [#allocation9], %s405
        %p407 = pneg %p103
        %p408 = pneg %p100
        %p409 = pneg %p124
        %p410 = pneg %p121
        %p411 = pneg %p145
        %p412 = pneg %p142
        %p413 = pneg %p166
        %p414 = pneg %p163
        %p415 = pneg %p187
        %p416 = pneg %p184
        %p417 = pneg %p213
        %p418 = pneg %p210
        %s419 = sand.u32 %s200, 1
        %s420 = scalar_lea.sflag [#allocation5], %s419
        %s421 = sand.u32 %s200, 1
        %s422 = smul.addr %s421, 72
        %s423 = scalar_lea.vmem [#allocation16], %s422
        %v424 = vld [vmem:[%s357] sm:$0x1]
        %425 = vst [vmem:[#allocation2] sm:$0x1] %v424
        %v426 = vld [vmem:[%s348] sm:$0xff]
        %427 = vst [vmem:[#allocation2 + $0x1] sm:$0xff] %v426
        %v428 = vld [vmem:[%s357 + $0x1] sm:$0x1]
        %429 = vst [vmem:[#allocation2 + $0x9] sm:$0x1] %v428
        %s430 = scalar_lea.vmem %s357, 2 [#allocation7]
        %v431 = vld [vmem:[%s430] sm:$0x1]
        %s432 = scalar_lea.vmem [#allocation2], 16
        %433 = vst [vmem:[%s432] sm:$0x1] %v431
        %s434 = scalar_lea.vmem %s348, 8 [#allocation3]
        %v435 = vld [vmem:[%s434] sm:$0xff]
        %436 = vst [vmem:[%s432 + $0x1] sm:$0xff] %v435
        %v437 = vld [vmem:[%s430 + $0x1] sm:$0x1]
        %438 = vst [vmem:[%s432 + $0x9] sm:$0x1] %v437
        %s439 = scalar_lea.vmem %s357, 4 [#allocation7]
        %v440 = vld [vmem:[%s439] sm:$0x1]
        %s441 = scalar_lea.vmem [#allocation2], 32
        %442 = vst [vmem:[%s441] sm:$0x1] %v440
        %s443 = scalar_lea.vmem %s348, 16 [#allocation3]
        %v444 = vld [vmem:[%s443] sm:$0xff]
        %445 = vst [vmem:[%s441 + $0x1] sm:$0xff] %v444
        %v446 = vld [vmem:[%s439 + $0x1] sm:$0x1]
        %447 = vst [vmem:[%s441 + $0x9] sm:$0x1] %v446
        %s448 = sld [smem:[#allocation10]]
        %s449 = sld [smem:[#allocation10 + $0x1]]
        %s450 = sld [smem:[#allocation10 + $0x2]]
        %s451 = sld [smem:[#allocation10 + $0x3]]
        %s452 = sld [smem:[#allocation10 + $0x4]]
        %s453 = sld [smem:[#allocation10 + $0x5]]
        %s454 = sld [smem:[#allocation10 + $0x6]]
        %s455 = sld [smem:[#allocation10 + $0x7]]
        %s456 = sld [smem:[#allocation10 + $0x8]]
        %s457 = sld [smem:[#allocation10 + $0x9]]
        %s458 = sld [smem:[#allocation10 + $0xa]]
        %s459 = sld [smem:[#allocation10 + $0xb]]
        %s460 = sld [smem:[#allocation10 + $0xc]]
        %s461 = sld [smem:[#allocation10 + $0xd]]
        %s462 = sld [smem:[#allocation10 + $0xe]]
        %s463 = sld [smem:[#allocation10 + $0xf]]
        %s464 = sld [smem:[#allocation10 + $0x10]]
        %s465 = sld [smem:[#allocation10 + $0x11]]
        %s466 = sld [smem:[#allocation10 + $0x12]]
        %s467 = sld [smem:[#allocation10 + $0x13]]
        %s468 = sld [smem:[#allocation10 + $0x14]]
        %s469 = sld [smem:[#allocation10 + $0x15]]
        %s470 = sld [smem:[#allocation10 + $0x16]]
        %s471 = sld [smem:[#allocation10 + $0x17]]
        %s472 = sld [smem:[#allocation10 + $0x18]]
        %s473 = sld [smem:[#allocation10 + $0x19]]
        %s474 = sld [smem:[#allocation10 + $0x1a]]
        %s475 = sld [smem:[#allocation10 + $0x1b]]
        %s476 = sld [smem:[#allocation10 + $0x1c]]
        %s477 = sld [smem:[#allocation10 + $0x1d]]
        %s478 = sld [smem:[#allocation10 + $0x1e]]
        %s479 = sld [smem:[#allocation10 + $0x1f]]
        %s480 = sld [smem:[#allocation10 + $0x20]]
        %s481 = sld [smem:[#allocation10 + $0x21]]
        %s482 = sld [smem:[#allocation10 + $0x22]]
        %s483 = sld [smem:[#allocation10 + $0x23]]
        %s484 = sld [smem:[#allocation10 + $0x24]]
        %s485 = sld [smem:[#allocation10 + $0x25]]
        %s486 = sld [smem:[#allocation10 + $0x26]]
        %s487 = sld [smem:[#allocation10 + $0x27]]
        %s488 = sld [smem:[#allocation10 + $0x28]]
        %s489 = sld [smem:[#allocation10 + $0x29]]
        %s490 = sld [smem:[#allocation10 + $0x2a]]
        %s491 = sld [smem:[#allocation10 + $0x2b]]
        %s492 = sld [smem:[#allocation10 + $0x2c]]
        %s493 = sld [smem:[#allocation10 + $0x2d]]
        %s494 = sld [smem:[#allocation10 + $0x2e]]
        %s495 = sld [smem:[#allocation10 + $0x2f]]
        %s496 = sld [smem:[#allocation10 + $0x30]]
        %s497 = sld [smem:[#allocation10 + $0x31]]
        %s498 = sld [smem:[#allocation10 + $0x32]]
        %s499 = sld [smem:[#allocation10 + $0x33]]
        %s500 = sld [smem:[#allocation10 + $0x34]]
        %s501 = sld [smem:[#allocation10 + $0x35]]
        %s502 = sld [smem:[#allocation10 + $0x36]]
        %s503 = sld [smem:[#allocation10 + $0x37]]
        %s504 = sld [smem:[#allocation10 + $0x38]]
        %s505 = sld [smem:[#allocation10 + $0x39]]
        %s506 = sld [smem:[#allocation10 + $0x3a]]
        %s507 = sld [smem:[#allocation10 + $0x3b]]
        %s508 = sld [smem:[#allocation10 + $0x3c]]
        %s509 = sld [smem:[#allocation10 + $0x3d]]
        %s510 = sld [smem:[#allocation10 + $0x3e]]
        %s511 = sld [smem:[#allocation10 + $0x3f]]
        %s512 = sld [smem:[#allocation10 + $0x40]]
        %s513 = sld [smem:[#allocation10 + $0x41]]
        %s514 = sld [smem:[#allocation10 + $0x42]]
        %s515 = sld [smem:[#allocation10 + $0x43]]
        %s516 = sld [smem:[#allocation10 + $0x44]]
        %s517 = sld [smem:[#allocation10 + $0x45]]
        %s518 = sld [smem:[#allocation10 + $0x46]]
        %s519 = sld [smem:[#allocation10 + $0x47]]
        %s520 = sld [smem:[#allocation10 + $0x48]]
        %s521 = sld [smem:[#allocation10 + $0x49]]
        %s522 = sld [smem:[#allocation10 + $0x4a]]
        %s523 = sld [smem:[#allocation10 + $0x4b]]
        %s524 = sld [smem:[#allocation10 + $0x4c]]
        %s525 = sld [smem:[#allocation10 + $0x4d]]
        %s526 = sld [smem:[#allocation10 + $0x4e]]
        %s527 = sld [smem:[#allocation10 + $0x4f]]
        %s528 = sld [smem:[#allocation10 + $0x50]]
        %s529 = sld [smem:[#allocation10 + $0x51]]
        %s530 = sld [smem:[#allocation10 + $0x52]]
        %s531 = sld [smem:[#allocation10 + $0x53]]
        %s532 = sld [smem:[#allocation10 + $0x54]]
        %s533 = sld [smem:[#allocation10 + $0x55]]
        %s534 = sld [smem:[#allocation10 + $0x56]]
        %s535 = sld [smem:[#allocation10 + $0x57]]
        %s536 = sld [smem:[#allocation10 + $0x58]]
        %s537 = sld [smem:[#allocation10 + $0x59]]
        %s538 = sld [smem:[#allocation10 + $0x5a]]
        %s539 = sld [smem:[#allocation10 + $0x5b]]
        %s540 = sld [smem:[#allocation10 + $0x5c]]
        %s541 = sld [smem:[#allocation10 + $0x5d]]
        %s542 = sld [smem:[#allocation10 + $0x5e]]
        %s543 = sld [smem:[#allocation10 + $0x5f]]
        %s544 = sld [smem:[#allocation10 + $0x60]]
        %s545 = sld [smem:[#allocation10 + $0x61]]
        %s546 = sld [smem:[#allocation10 + $0x62]]
        %s547 = sld [smem:[#allocation10 + $0x63]]
        %s548 = sld [smem:[#allocation10 + $0x64]]
        %s549 = sld [smem:[#allocation10 + $0x65]]
        %s550 = sld [smem:[#allocation10 + $0x66]]
        %s551 = sld [smem:[#allocation10 + $0x67]]
        %s552 = sld [smem:[#allocation10 + $0x68]]
        %s553 = sld [smem:[#allocation10 + $0x69]]
        %s554 = sld [smem:[#allocation10 + $0x6a]]
        %s555 = sld [smem:[#allocation10 + $0x6b]]
        %s556 = sld [smem:[#allocation10 + $0x6c]]
        %s557 = sld [smem:[#allocation10 + $0x6d]]
        %s558 = sld [smem:[#allocation10 + $0x6e]]
        %s559 = sld [smem:[#allocation10 + $0x6f]]
        %s560 = sld [smem:[#allocation10 + $0x70]]
        %s561 = sld [smem:[#allocation10 + $0x71]]
        %s562 = sld [smem:[#allocation10 + $0x72]]
        %s563 = sld [smem:[#allocation10 + $0x73]]
        %s564 = sld [smem:[#allocation10 + $0x74]]
        %s565 = sld [smem:[#allocation10 + $0x75]]
        %s566 = sld [smem:[#allocation10 + $0x76]]
        %s567 = sld [smem:[#allocation10 + $0x77]]
        %s568 = sld [smem:[#allocation10 + $0x78]]
        %s569 = sld [smem:[#allocation10 + $0x79]]
        %s570 = sld [smem:[#allocation10 + $0x7a]]
        %s571 = sld [smem:[#allocation10 + $0x7b]]
        %s572 = sld [smem:[#allocation10 + $0x7c]]
        %s573 = sld [smem:[#allocation10 + $0x7d]]
        %s574 = sld [smem:[#allocation10 + $0x7e]]
        %s575 = sld [smem:[#allocation10 + $0x7f]]
        %s576 = sld [smem:[#allocation10 + $0x80]]
        %s577 = sld [smem:[#allocation10 + $0x81]]
        %s578 = sld [smem:[#allocation10 + $0x82]]
        %s579 = sld [smem:[#allocation10 + $0x83]]
        %s580 = sld [smem:[#allocation10 + $0x84]]
        %s581 = sld [smem:[#allocation10 + $0x85]]
        %s582 = sld [smem:[#allocation10 + $0x86]]
        %s583 = sld [smem:[#allocation11]]
        %s584 = sld [smem:[#allocation11 + $0x1]]
        %s585 = sld [smem:[#allocation11 + $0x2]]
        %s586 = sld [smem:[#allocation11 + $0x3]]
        %s587 = sld [smem:[#allocation11 + $0x4]]
        %s588 = sld [smem:[#allocation13]]
        %s589 = sld [smem:[#allocation13 + $0x1]]
        %s590 = sld [smem:[#allocation13 + $0x2]]
        %s591 = sld [smem:[#allocation13 + $0x3]]
        %s592 = sld [smem:[#allocation13 + $0x4]]
        %s593 = sld [smem:[#allocation13 + $0x5]]
        %s594 = sld [smem:[#allocation13 + $0x6]]
        %s595 = sld [smem:[#allocation13 + $0x7]]
        %s596 = sld [smem:[#allocation13 + $0x8]]
        %s597 = sld [smem:[#allocation13 + $0x9]]
        %s598 = sld [smem:[#allocation13 + $0xa]]
        %s599 = sld [smem:[#allocation13 + $0xb]]
        %s600 = sld [smem:[#allocation13 + $0xc]]
        %s601 = sld [smem:[#allocation13 + $0xd]]
        %s602 = sld [smem:[#allocation13 + $0xe]]
        %s603 = sld [smem:[#allocation14]]
        %s604 = sld [smem:[#allocation14 + $0x1]]
        %s605 = sld [smem:[#allocation14 + $0x2]]
        %v606 = vld [vmem:[#allocation2] sm:$0xff]
        %607 = vrot.lane.b32.xlu0 %v606, 1
        %v608 = vpop.permute.xlu0 %607
        %609 = vrot.lane.b32.xlu0 %v606, 127
        %v610 = vpop.permute.xlu0 %609
        %v611 = vstv %s448
        %v612 = vmul.f32 %v611, %v608
        %v613 = vstv %s475
        %v614 = vmul.f32 %v613, %v608
        %v615 = vstv %s502
        %v616 = vmul.f32 %v615, %v608
        %v617 = vstv %s529
        %v618 = vmul.f32 %v617, %v608
        %v619 = vstv %s556
        %v620 = vmul.f32 %v619, %v608
        %v621 = vstv %s449
        %v622 = vmul.f32 %v621, %v606
        %v623 = vadd.f32 %v612, %v622
        %v624 = vstv %s476
        %v625 = vmul.f32 %v624, %v606
        %v626 = vadd.f32 %v614, %v625
        %v627 = vstv %s503
        %v628 = vmul.f32 %v627, %v606
        %v629 = vadd.f32 %v616, %v628
        %v630 = vstv %s530
        %v631 = vmul.f32 %v630, %v606
        %v632 = vadd.f32 %v618, %v631
        %v633 = vstv %s557
        %v634 = vmul.f32 %v633, %v606
        %v635 = vadd.f32 %v620, %v634
        %v636 = vstv %s450
        %v637 = vmul.f32 %v636, %v610
        %v638 = vadd.f32 %v623, %v637
        %v639 = vstv %s477
        %v640 = vmul.f32 %v639, %v610
        %v641 = vadd.f32 %v626, %v640
        %v642 = vstv %s504
        %v643 = vmul.f32 %v642, %v610
        %v644 = vadd.f32 %v629, %v643
        %v645 = vstv %s531
        %v646 = vmul.f32 %v645, %v610
        %v647 = vadd.f32 %v632, %v646
        %v648 = vstv %s558
        %v649 = vmul.f32 %v648, %v610
        %v650 = vadd.f32 %v635, %v649
        %v651 = vld [vmem:[%s348] sm:$0xff]
        %652 = vrot.lane.b32.xlu0 %v651, 1
        %v653 = vpop.permute.xlu0 %652
        %654 = vrot.lane.b32.xlu0 %v651, 127
        %v655 = vpop.permute.xlu0 %654
        %v656 = vstv %s451
        %v657 = vmul.f32 %v656, %v653
        %v658 = vadd.f32 %v638, %v657
        %v659 = vstv %s478
        %v660 = vmul.f32 %v659, %v653
        %v661 = vadd.f32 %v641, %v660
        %v662 = vstv %s505
        %v663 = vmul.f32 %v662, %v653
        %v664 = vadd.f32 %v644, %v663
        %v665 = vstv %s532
        %v666 = vmul.f32 %v665, %v653
        %v667 = vadd.f32 %v647, %v666
        %v668 = vstv %s559
        %v669 = vmul.f32 %v668, %v653
        %v670 = vadd.f32 %v650, %v669
        %v671 = vstv %s452
        %v672 = vmul.f32 %v671, %v651
        %v673 = vadd.f32 %v658, %v672
        %v674 = vstv %s479
        %v675 = vmul.f32 %v674, %v651
        %v676 = vadd.f32 %v661, %v675
        %v677 = vstv %s506
        %v678 = vmul.f32 %v677, %v651
        %v679 = vadd.f32 %v664, %v678
        %v680 = vstv %s533
        %v681 = vmul.f32 %v680, %v651
        %v682 = vadd.f32 %v667, %v681
        %v683 = vstv %s560
        %v684 = vmul.f32 %v683, %v651
        %v685 = vadd.f32 %v670, %v684
        %v686 = vstv %s453
        %v687 = vmul.f32 %v686, %v655
        %v688 = vadd.f32 %v673, %v687
        %v689 = vstv %s480
        %v690 = vmul.f32 %v689, %v655
        %v691 = vadd.f32 %v676, %v690
        %v692 = vstv %s507
        %v693 = vmul.f32 %v692, %v655
        %v694 = vadd.f32 %v679, %v693
        %v695 = vstv %s534
        %v696 = vmul.f32 %v695, %v655
        %v697 = vadd.f32 %v682, %v696
        %v698 = vstv %s561
        %v699 = vmul.f32 %v698, %v655
        %v700 = vadd.f32 %v685, %v699
        %s701 = sadd.s32 0, 2
        %s702 = scalar_lea.vmem [#allocation2], %s701
        %v703 = vld [vmem:[%s702] sm:$0xff]
        %704 = vrot.lane.b32.xlu0 %v703, 1
        %v705 = vpop.permute.xlu0 %704
        %706 = vrot.lane.b32.xlu0 %v703, 127
        %v707 = vpop.permute.xlu0 %706
        %v708 = vstv %s454
        %v709 = vmul.f32 %v708, %v705
        %v710 = vadd.f32 %v688, %v709
        %v711 = vstv %s481
        %v712 = vmul.f32 %v711, %v705
        %v713 = vadd.f32 %v691, %v712
        %v714 = vstv %s508
        %v715 = vmul.f32 %v714, %v705
        %v716 = vadd.f32 %v694, %v715
        %v717 = vstv %s535
        %v718 = vmul.f32 %v717, %v705
        %v719 = vadd.f32 %v697, %v718
        %v720 = vstv %s562
        %v721 = vmul.f32 %v720, %v705
        %v722 = vadd.f32 %v700, %v721
        %v723 = vstv %s455
        %v724 = vmul.f32 %v723, %v703
        %v725 = vadd.f32 %v710, %v724
        %v726 = vstv %s482
        %v727 = vmul.f32 %v726, %v703
        %v728 = vadd.f32 %v713, %v727
        %v729 = vstv %s509
        %v730 = vmul.f32 %v729, %v703
        %v731 = vadd.f32 %v716, %v730
        %v732 = vstv %s536
        %v733 = vmul.f32 %v732, %v703
        %v734 = vadd.f32 %v719, %v733
        %v735 = vstv %s563
        %v736 = vmul.f32 %v735, %v703
        %v737 = vadd.f32 %v722, %v736
        %v738 = vstv %s456
        %v739 = vmul.f32 %v738, %v707
        %v740 = vadd.f32 %v725, %v739
        %v741 = vstv %s483
        %v742 = vmul.f32 %v741, %v707
        %v743 = vadd.f32 %v728, %v742
        %v744 = vstv %s510
        %v745 = vmul.f32 %v744, %v707
        %v746 = vadd.f32 %v731, %v745
        %v747 = vstv %s537
        %v748 = vmul.f32 %v747, %v707
        %v749 = vadd.f32 %v734, %v748
        %v750 = vstv %s564
        %v751 = vmul.f32 %v750, %v707
        %v752 = vadd.f32 %v737, %v751
        %s753 = sadd.s32 0, 16
        %s754 = scalar_lea.vmem [#allocation2], %s753
        %v755 = vld [vmem:[%s754] sm:$0xff]
        %756 = vrot.lane.b32.xlu0 %v755, 1
        %v757 = vpop.permute.xlu0 %756
        %758 = vrot.lane.b32.xlu0 %v755, 127
        %v759 = vpop.permute.xlu0 %758
        %v760 = vstv %s457
        %v761 = vmul.f32 %v760, %v757
        %v762 = vadd.f32 %v740, %v761
        %v763 = vstv %s484
        %v764 = vmul.f32 %v763, %v757
        %v765 = vadd.f32 %v743, %v764
        %v766 = vstv %s511
        %v767 = vmul.f32 %v766, %v757
        %v768 = vadd.f32 %v746, %v767
        %v769 = vstv %s538
        %v770 = vmul.f32 %v769, %v757
        %v771 = vadd.f32 %v749, %v770
        %v772 = vstv %s565
        %v773 = vmul.f32 %v772, %v757
        %v774 = vadd.f32 %v752, %v773
        %v775 = vstv %s458
        %v776 = vmul.f32 %v775, %v755
        %v777 = vadd.f32 %v762, %v776
        %v778 = vstv %s485
        %v779 = vmul.f32 %v778, %v755
        %v780 = vadd.f32 %v765, %v779
        %v781 = vstv %s512
        %v782 = vmul.f32 %v781, %v755
        %v783 = vadd.f32 %v768, %v782
        %v784 = vstv %s539
        %v785 = vmul.f32 %v784, %v755
        %v786 = vadd.f32 %v771, %v785
        %v787 = vstv %s566
        %v788 = vmul.f32 %v787, %v755
        %v789 = vadd.f32 %v774, %v788
        %v790 = vstv %s459
        %v791 = vmul.f32 %v790, %v759
        %v792 = vadd.f32 %v777, %v791
        %v793 = vstv %s486
        %v794 = vmul.f32 %v793, %v759
        %v795 = vadd.f32 %v780, %v794
        %v796 = vstv %s513
        %v797 = vmul.f32 %v796, %v759
        %v798 = vadd.f32 %v783, %v797
        %v799 = vstv %s540
        %v800 = vmul.f32 %v799, %v759
        %v801 = vadd.f32 %v786, %v800
        %v802 = vstv %s567
        %v803 = vmul.f32 %v802, %v759
        %v804 = vadd.f32 %v789, %v803
        %s805 = sadd.s32 0, 8
        %s806 = scalar_lea.vmem %s348, %s805 [#allocation3]
        %v807 = vld [vmem:[%s806] sm:$0xff]
        %808 = vrot.lane.b32.xlu0 %v807, 1
        %v809 = vpop.permute.xlu0 %808
        %810 = vrot.lane.b32.xlu0 %v807, 127
        %v811 = vpop.permute.xlu0 %810
        %v812 = vstv %s460
        %v813 = vmul.f32 %v812, %v809
        %v814 = vadd.f32 %v792, %v813
        %v815 = vstv %s487
        %v816 = vmul.f32 %v815, %v809
        %v817 = vadd.f32 %v795, %v816
        %v818 = vstv %s514
        %v819 = vmul.f32 %v818, %v809
        %v820 = vadd.f32 %v798, %v819
        %v821 = vstv %s541
        %v822 = vmul.f32 %v821, %v809
        %v823 = vadd.f32 %v801, %v822
        %v824 = vstv %s568
        %v825 = vmul.f32 %v824, %v809
        %v826 = vadd.f32 %v804, %v825
        %v827 = vstv %s461
        %v828 = vmul.f32 %v827, %v807
        %v829 = vadd.f32 %v814, %v828
        %v830 = vstv %s488
        %v831 = vmul.f32 %v830, %v807
        %v832 = vadd.f32 %v817, %v831
        %v833 = vstv %s515
        %v834 = vmul.f32 %v833, %v807
        %v835 = vadd.f32 %v820, %v834
        %v836 = vstv %s542
        %v837 = vmul.f32 %v836, %v807
        %v838 = vadd.f32 %v823, %v837
        %v839 = vstv %s569
        %v840 = vmul.f32 %v839, %v807
        %v841 = vadd.f32 %v826, %v840
        %v842 = vstv %s462
        %v843 = vmul.f32 %v842, %v811
        %v844 = vadd.f32 %v829, %v843
        %v845 = vstv %s489
        %v846 = vmul.f32 %v845, %v811
        %v847 = vadd.f32 %v832, %v846
        %v848 = vstv %s516
        %v849 = vmul.f32 %v848, %v811
        %v850 = vadd.f32 %v835, %v849
        %v851 = vstv %s543
        %v852 = vmul.f32 %v851, %v811
        %v853 = vadd.f32 %v838, %v852
        %v854 = vstv %s570
        %v855 = vmul.f32 %v854, %v811
        %v856 = vadd.f32 %v841, %v855
        %s857 = sadd.s32 %s701, 16
        %s858 = scalar_lea.vmem [#allocation2], %s857
        %v859 = vld [vmem:[%s858] sm:$0xff]
        %860 = vrot.lane.b32.xlu0 %v859, 1
        %v861 = vpop.permute.xlu0 %860
        %862 = vrot.lane.b32.xlu0 %v859, 127
        %v863 = vpop.permute.xlu0 %862
        %v864 = vstv %s463
        %v865 = vmul.f32 %v864, %v861
        %v866 = vadd.f32 %v844, %v865
        %v867 = vstv %s490
        %v868 = vmul.f32 %v867, %v861
        %v869 = vadd.f32 %v847, %v868
        %v870 = vstv %s517
        %v871 = vmul.f32 %v870, %v861
        %v872 = vadd.f32 %v850, %v871
        %v873 = vstv %s544
        %v874 = vmul.f32 %v873, %v861
        %v875 = vadd.f32 %v853, %v874
        %v876 = vstv %s571
        %v877 = vmul.f32 %v876, %v861
        %v878 = vadd.f32 %v856, %v877
        %v879 = vstv %s464
        %v880 = vmul.f32 %v879, %v859
        %v881 = vadd.f32 %v866, %v880
        %v882 = vstv %s491
        %v883 = vmul.f32 %v882, %v859
        %v884 = vadd.f32 %v869, %v883
        %v885 = vstv %s518
        %v886 = vmul.f32 %v885, %v859
        %v887 = vadd.f32 %v872, %v886
        %v888 = vstv %s545
        %v889 = vmul.f32 %v888, %v859
        %v890 = vadd.f32 %v875, %v889
        %v891 = vstv %s572
        %v892 = vmul.f32 %v891, %v859
        %v893 = vadd.f32 %v878, %v892
        %v894 = vstv %s465
        %v895 = vmul.f32 %v894, %v863
        %v896 = vadd.f32 %v881, %v895
        %v897 = vstv %s492
        %v898 = vmul.f32 %v897, %v863
        %v899 = vadd.f32 %v884, %v898
        %v900 = vstv %s519
        %v901 = vmul.f32 %v900, %v863
        %v902 = vadd.f32 %v887, %v901
        %v903 = vstv %s546
        %v904 = vmul.f32 %v903, %v863
        %v905 = vadd.f32 %v890, %v904
        %v906 = vstv %s573
        %v907 = vmul.f32 %v906, %v863
        %v908 = vadd.f32 %v893, %v907
        %s909 = sadd.s32 0, 32
        %s910 = scalar_lea.vmem [#allocation2], %s909
        %v911 = vld [vmem:[%s910] sm:$0xff]
        %912 = vrot.lane.b32.xlu0 %v911, 1
        %v913 = vpop.permute.xlu0 %912
        %914 = vrot.lane.b32.xlu0 %v911, 127
        %v915 = vpop.permute.xlu0 %914
        %v916 = vstv %s466
        %v917 = vmul.f32 %v916, %v913
        %v918 = vadd.f32 %v896, %v917
        %v919 = vstv %s493
        %v920 = vmul.f32 %v919, %v913
        %v921 = vadd.f32 %v899, %v920
        %v922 = vstv %s520
        %v923 = vmul.f32 %v922, %v913
        %v924 = vadd.f32 %v902, %v923
        %v925 = vstv %s547
        %v926 = vmul.f32 %v925, %v913
        %v927 = vadd.f32 %v905, %v926
        %v928 = vstv %s574
        %v929 = vmul.f32 %v928, %v913
        %v930 = vadd.f32 %v908, %v929
        %v931 = vstv %s467
        %v932 = vmul.f32 %v931, %v911
        %v933 = vadd.f32 %v918, %v932
        %v934 = vstv %s494
        %v935 = vmul.f32 %v934, %v911
        %v936 = vadd.f32 %v921, %v935
        %v937 = vstv %s521
        %v938 = vmul.f32 %v937, %v911
        %v939 = vadd.f32 %v924, %v938
        %v940 = vstv %s548
        %v941 = vmul.f32 %v940, %v911
        %v942 = vadd.f32 %v927, %v941
        %v943 = vstv %s575
        %v944 = vmul.f32 %v943, %v911
        %v945 = vadd.f32 %v930, %v944
        %v946 = vstv %s468
        %v947 = vmul.f32 %v946, %v915
        %v948 = vadd.f32 %v933, %v947
        %v949 = vstv %s495
        %v950 = vmul.f32 %v949, %v915
        %v951 = vadd.f32 %v936, %v950
        %v952 = vstv %s522
        %v953 = vmul.f32 %v952, %v915
        %v954 = vadd.f32 %v939, %v953
        %v955 = vstv %s549
        %v956 = vmul.f32 %v955, %v915
        %v957 = vadd.f32 %v942, %v956
        %v958 = vstv %s576
        %v959 = vmul.f32 %v958, %v915
        %v960 = vadd.f32 %v945, %v959
        %s961 = scalar_lea.vmem %s348, %s753 [#allocation3]
        %v962 = vld [vmem:[%s961] sm:$0xff]
        %963 = vrot.lane.b32.xlu0 %v962, 1
        %v964 = vpop.permute.xlu0 %963
        %965 = vrot.lane.b32.xlu0 %v962, 127
        %v966 = vpop.permute.xlu0 %965
        %v967 = vstv %s469
        %v968 = vmul.f32 %v967, %v964
        %v969 = vadd.f32 %v948, %v968
        %v970 = vstv %s496
        %v971 = vmul.f32 %v970, %v964
        %v972 = vadd.f32 %v951, %v971
        %v973 = vstv %s523
        %v974 = vmul.f32 %v973, %v964
        %v975 = vadd.f32 %v954, %v974
        %v976 = vstv %s550
        %v977 = vmul.f32 %v976, %v964
        %v978 = vadd.f32 %v957, %v977
        %v979 = vstv %s577
        %v980 = vmul.f32 %v979, %v964
        %v981 = vadd.f32 %v960, %v980
        %v982 = vstv %s470
        %v983 = vmul.f32 %v982, %v962
        %v984 = vadd.f32 %v969, %v983
        %v985 = vstv %s497
        %v986 = vmul.f32 %v985, %v962
        %v987 = vadd.f32 %v972, %v986
        %v988 = vstv %s524
        %v989 = vmul.f32 %v988, %v962
        %v990 = vadd.f32 %v975, %v989
        %v991 = vstv %s551
        %v992 = vmul.f32 %v991, %v962
        %v993 = vadd.f32 %v978, %v992
        %v994 = vstv %s578
        %v995 = vmul.f32 %v994, %v962
        %v996 = vadd.f32 %v981, %v995
        %v997 = vstv %s471
        %v998 = vmul.f32 %v997, %v966
        %v999 = vadd.f32 %v984, %v998
        %v1000 = vstv %s498
        %v1001 = vmul.f32 %v1000, %v966
        %v1002 = vadd.f32 %v987, %v1001
        %v1003 = vstv %s525
        %v1004 = vmul.f32 %v1003, %v966
        %v1005 = vadd.f32 %v990, %v1004
        %v1006 = vstv %s552
        %v1007 = vmul.f32 %v1006, %v966
        %v1008 = vadd.f32 %v993, %v1007
        %v1009 = vstv %s579
        %v1010 = vmul.f32 %v1009, %v966
        %v1011 = vadd.f32 %v996, %v1010
        %s1012 = sadd.s32 %s701, 32
        %s1013 = scalar_lea.vmem [#allocation2], %s1012
        %v1014 = vld [vmem:[%s1013] sm:$0xff]
        %1015 = vrot.lane.b32.xlu0 %v1014, 1
        %v1016 = vpop.permute.xlu0 %1015
        %1017 = vrot.lane.b32.xlu0 %v1014, 127
        %v1018 = vpop.permute.xlu0 %1017
        %v1019 = vstv %s472
        %v1020 = vmul.f32 %v1019, %v1016
        %v1021 = vadd.f32 %v999, %v1020
        %v1022 = vstv %s499
        %v1023 = vmul.f32 %v1022, %v1016
        %v1024 = vadd.f32 %v1002, %v1023
        %v1025 = vstv %s526
        %v1026 = vmul.f32 %v1025, %v1016
        %v1027 = vadd.f32 %v1005, %v1026
        %v1028 = vstv %s553
        %v1029 = vmul.f32 %v1028, %v1016
        %v1030 = vadd.f32 %v1008, %v1029
        %v1031 = vstv %s580
        %v1032 = vmul.f32 %v1031, %v1016
        %v1033 = vadd.f32 %v1011, %v1032
        %v1034 = vstv %s473
        %v1035 = vmul.f32 %v1034, %v1014
        %v1036 = vadd.f32 %v1021, %v1035
        %v1037 = vstv %s500
        %v1038 = vmul.f32 %v1037, %v1014
        %v1039 = vadd.f32 %v1024, %v1038
        %v1040 = vstv %s527
        %v1041 = vmul.f32 %v1040, %v1014
        %v1042 = vadd.f32 %v1027, %v1041
        %v1043 = vstv %s554
        %v1044 = vmul.f32 %v1043, %v1014
        %v1045 = vadd.f32 %v1030, %v1044
        %v1046 = vstv %s581
        %v1047 = vmul.f32 %v1046, %v1014
        %v1048 = vadd.f32 %v1033, %v1047
        %v1049 = vstv %s474
        %v1050 = vmul.f32 %v1049, %v1018
        %v1051 = vadd.f32 %v1036, %v1050
        %v1052 = vstv %s501
        %v1053 = vmul.f32 %v1052, %v1018
        %v1054 = vadd.f32 %v1039, %v1053
        %v1055 = vstv %s528
        %v1056 = vmul.f32 %v1055, %v1018
        %v1057 = vadd.f32 %v1042, %v1056
        %v1058 = vstv %s555
        %v1059 = vmul.f32 %v1058, %v1018
        %v1060 = vadd.f32 %v1045, %v1059
        %v1061 = vstv %s582
        %v1062 = vmul.f32 %v1061, %v1018
        %v1063 = vadd.f32 %v1048, %v1062
        %v1064 = vstv %s583
        %v1065 = vadd.f32 %v1051, %v1064
        %v1066 = vxor.u32 %v1065, 2147483648
        %v1067 = vmul.f32 %v1066, 1.442695
        %v1068 = vpow.pop %v1067
        %v1069 = vadd.f32 %v1068, 1.0
        %v1070 = vrcp.pop %v1069
        %v1071 = vmul.f32 1.0, %v1070
        %v1072 = vstv %s584
        %v1073 = vadd.f32 %v1054, %v1072
        %v1074 = vxor.u32 %v1073, 2147483648
        %v1075 = vmul.f32 %v1074, 1.442695
        %v1076 = vpow.pop %v1075
        %v1077 = vadd.f32 %v1076, 1.0
        %v1078 = vrcp.pop %v1077
        %v1079 = vmul.f32 1.0, %v1078
        %v1080 = vstv %s585
        %v1081 = vadd.f32 %v1057, %v1080
        %v1082 = vxor.u32 %v1081, 2147483648
        %v1083 = vmul.f32 %v1082, 1.442695
        %v1084 = vpow.pop %v1083
        %v1085 = vadd.f32 %v1084, 1.0
        %v1086 = vrcp.pop %v1085
        %v1087 = vmul.f32 1.0, %v1086
        %v1088 = vstv %s586
        %v1089 = vadd.f32 %v1060, %v1088
        %v1090 = vxor.u32 %v1089, 2147483648
        %v1091 = vmul.f32 %v1090, 1.442695
        %v1092 = vpow.pop %v1091
        %v1093 = vadd.f32 %v1092, 1.0
        %v1094 = vrcp.pop %v1093
        %v1095 = vmul.f32 1.0, %v1094
        %v1096 = vstv %s587
        %v1097 = vadd.f32 %v1063, %v1096
        %v1098 = vxor.u32 %v1097, 2147483648
        %v1099 = vmul.f32 %v1098, 1.442695
        %v1100 = vpow.pop %v1099
        %v1101 = vadd.f32 %v1100, 1.0
        %v1102 = vrcp.pop %v1101
        %v1103 = vmul.f32 1.0, %v1102
        %v1104 = vstv %s588
        %v1105 = vmul.f32 %v1104, %v1071
        %v1106 = vstv %s589
        %v1107 = vmul.f32 %v1106, %v1079
        %v1108 = vadd.f32 %v1105, %v1107
        %v1109 = vstv %s590
        %v1110 = vmul.f32 %v1109, %v1087
        %v1111 = vadd.f32 %v1108, %v1110
        %v1112 = vstv %s591
        %v1113 = vmul.f32 %v1112, %v1095
        %v1114 = vadd.f32 %v1111, %v1113
        %v1115 = vstv %s592
        %v1116 = vmul.f32 %v1115, %v1103
        %v1117 = vadd.f32 %v1114, %v1116
        %v1118 = vstv %s603
        %v1119 = vadd.f32 %v1117, %v1118
        %v1120 = vxor.u32 %v1119, 2147483648
        %v1121 = vmul.f32 %v1120, 1.442695
        %v1122 = vpow.pop %v1121
        %v1123 = vadd.f32 %v1122, 1.0
        %v1124 = vrcp.pop %v1123
        %v1125 = vmul.f32 1.0, %v1124
        %v1126 = vld [vmem:[%s366] sm:$0xff]
        %1127 = vst [vmem:[%s423] sm:$0xff] %v1125
        %v1128 = vmul.f32 %v1125, %v651
        %s1129 = sadd.s32 0, 24
        %s1130 = scalar_lea.vmem %s423, %s1129 [#allocation16]
        %1131 = vst [vmem:[%s1130] sm:$0xff] %v1128
        %v1132 = vmul.f32 %v1125, %v1126
        %s1133 = sadd.s32 0, 48
        %s1134 = scalar_lea.vmem %s423, %s1133 [#allocation16]
        %1135 = vst [vmem:[%s1134] sm:$0xff] %v1132
        %v1136 = vstv %s593
        %v1137 = vmul.f32 %v1136, %v1071
        %v1138 = vstv %s594
        %v1139 = vmul.f32 %v1138, %v1079
        %v1140 = vadd.f32 %v1137, %v1139
        %v1141 = vstv %s595
        %v1142 = vmul.f32 %v1141, %v1087
        %v1143 = vadd.f32 %v1140, %v1142
        %v1144 = vstv %s596
        %v1145 = vmul.f32 %v1144, %v1095
        %v1146 = vadd.f32 %v1143, %v1145
        %v1147 = vstv %s597
        %v1148 = vmul.f32 %v1147, %v1103
        %v1149 = vadd.f32 %v1146, %v1148
        %v1150 = vstv %s604
        %v1151 = vadd.f32 %v1149, %v1150
        %v1152 = vxor.u32 %v1151, 2147483648
        %v1153 = vmul.f32 %v1152, 1.442695
        %v1154 = vpow.pop %v1153
        %v1155 = vadd.f32 %v1154, 1.0
        %v1156 = vrcp.pop %v1155
        %v1157 = vmul.f32 1.0, %v1156
        %v1158 = vld [vmem:[%s806] sm:$0xff]
        %s1159 = scalar_lea.vmem %s366, %s805 [#allocation9]
        %v1160 = vld [vmem:[%s1159] sm:$0xff]
        %s1161 = scalar_lea.vmem %s423, %s805 [#allocation16]
        %1162 = vst [vmem:[%s1161] sm:$0xff] %v1157
        %v1163 = vmul.f32 %v1157, %v1158
        %s1164 = scalar_lea.vmem %s423, %s909 [#allocation16]
        %1165 = vst [vmem:[%s1164] sm:$0xff] %v1163
        %v1166 = vmul.f32 %v1157, %v1160
        %s1167 = sadd.s32 0, 56
        %s1168 = scalar_lea.vmem %s423, %s1167 [#allocation16]
        %1169 = vst [vmem:[%s1168] sm:$0xff] %v1166
        %v1170 = vstv %s598
        %v1171 = vmul.f32 %v1170, %v1071
        %v1172 = vstv %s599
        %v1173 = vmul.f32 %v1172, %v1079
        %v1174 = vadd.f32 %v1171, %v1173
        %v1175 = vstv %s600
        %v1176 = vmul.f32 %v1175, %v1087
        %v1177 = vadd.f32 %v1174, %v1176
        %v1178 = vstv %s601
        %v1179 = vmul.f32 %v1178, %v1095
        %v1180 = vadd.f32 %v1177, %v1179
        %v1181 = vstv %s602
        %v1182 = vmul.f32 %v1181, %v1103
        %v1183 = vadd.f32 %v1180, %v1182
        %v1184 = vstv %s605
        %v1185 = vadd.f32 %v1183, %v1184
        %v1186 = vxor.u32 %v1185, 2147483648
        %v1187 = vmul.f32 %v1186, 1.442695
        %v1188 = vpow.pop %v1187
        %v1189 = vadd.f32 %v1188, 1.0
        %v1190 = vrcp.pop %v1189
        %v1191 = vmul.f32 1.0, %v1190
        %v1192 = vld [vmem:[%s961] sm:$0xff]
        %s1193 = scalar_lea.vmem %s366, %s753 [#allocation9]
        %v1194 = vld [vmem:[%s1193] sm:$0xff]
        %s1195 = scalar_lea.vmem %s423, %s753 [#allocation16]
        %1196 = vst [vmem:[%s1195] sm:$0xff] %v1191
        %v1197 = vmul.f32 %v1191, %v1192
        %s1198 = sadd.s32 0, 40
        %s1199 = scalar_lea.vmem %s423, %s1198 [#allocation16]
        %1200 = vst [vmem:[%s1199] sm:$0xff] %v1197
        %v1201 = vmul.f32 %v1191, %v1194
        %s1202 = sadd.s32 0, 64
        %s1203 = scalar_lea.vmem %s423, %s1202 [#allocation16]
        %1204 = vst [vmem:[%s1203] sm:$0xff] %v1201
        %s1205 = sand.u32 %s200, 1
        %s1206 = scalar_lea.sflag [#allocation5], %s1205
        %s1207 = sand.u32 %s200, 1
        %s1208 = smul.addr %s1207, 72
        %s1209 = scalar_lea.vmem [#allocation16], %s1208
        // Predicated region
        $region77: #{tpu_custom_call.1} parent=47 // pred_check
          %p1210 = pneg %p210
        $region78: #{tpu_custom_call.1} parent=47 // pred_check_branch
          %1212 = sbr.rel (%p1210) target = $region80
        $region79: #{tpu_custom_call.1} parent=47 // pred_region
          %s1214 = ssub.s32 1152, 1152
          %1215 = vsyncadd %s1206, %s1214
          %s1216 = smul.addr %s30, 128
          %s1217 = scalar_lea.hbm %s7, %s1216
          %s1218 = sshll.u32 %s1209, 4
          %s1219 = int_to_ptr.vmem [resolvable:$true] %s1218
          %1224 = dma.vmem_to_hbm [thread:$0]  %s1219, 1152, %s1217, %s1206, 128, 256, 8
        $region80: #{tpu_custom_call.1} parent=47 // pred_fallthru
          _
      $region48: #{tpu_custom_call.1} parent=5 // pred_fallthru
        _
      %p1225 = scmp.le.s32.totalorder 2, %s25
      // Predicated region
      $region81: #{tpu_custom_call.1} parent=5 // pred_check
        %p1226 = pneg %p1225
      $region82: #{tpu_custom_call.1} parent=5 // pred_check_branch
        %1228 = sbr.rel (%p1226) target = $region84
      $region83: #{tpu_custom_call.1} parent=5 // pred_region
        %s1229 = ssub.s32 %s25, 2
        // Predicated region
        $region85: #{tpu_custom_call.1} parent=83 // pred_check
          %p1230 = pneg %p216
        $region86: #{tpu_custom_call.1} parent=83 // pred_check_branch
          %1232 = sbr.rel (%p1230) target = $region88
        $region87: #{tpu_custom_call.1} parent=83 // pred_region
          %s1233 = sand.u32 %s201, 1
          %s1234 = scalar_lea.sflag [#allocation5], %s1233
          %s1235 = sand.u32 %s201, 1
          %s1236 = smul.addr %s1235, 72
          %s1237 = scalar_lea.vmem [#allocation16], %s1236
          %1238 = dma.done %s1234, 1152
        $region88: #{tpu_custom_call.1} parent=83 // pred_fallthru
          _
      $region84: #{tpu_custom_call.1} parent=5 // pred_fallthru
        _
    $region6: #{tpu_custom_call.1} parent=1 // loop_footer
      %s29 = sadd.s32 1, %s25
    $region7: #{tpu_custom_call.1} parent=1 // loop_footer_branch
      %24 = sbr.rel target = $region3
    $region8: #{tpu_custom_call.1} parent=1 // loop_exit
      _
    %1239 = vsyncpa [#allocation4], 1
    %s1240 = scalar_lea.sflag [#allocation4], 1
    %1241 = vsyncpa %s1240, 1
    %1242 = vsyncpa [#allocation8], 1
    %s1243 = scalar_lea.sflag [#allocation8], 1
    %1244 = vsyncpa %s1243, 1
    %1245 = vsyncpa [#allocation5], 1
    %s1246 = scalar_lea.sflag [#allocation5], 1
    %1247 = vsyncpa %s1246, 1
    %1248 = vsyncpa [#allocation6], 1
    %s1249 = scalar_lea.sflag [#allocation6], 1
    %1250 = vsyncpa %s1249, 1
    %1251 = vsyncpa [#allocation12], 1
    %1252 = vsyncpa [#allocation15], 1

</llo_original>
